<compile_context>
chip_gen: v7x
topology: tpu7x:2x2x1
jax: 0.10.0
libtpu: 0.0.40
codegen_flags: <defaults>
</compile_context>

<pallas_src>
import math
import functools

import jax
import jax.numpy as jnp
from jax import lax
from jax.experimental import pallas as pl
from jax.experimental.pallas import tpu as pltpu

LN_EPS = 1e-5  # GPT2 layer_norm_epsilon default


# ----------------------------- in-kernel helpers -----------------------------

def _gelu_new(x):
    # GPT-2 "gelu_new" (tanh approximation), f32
    return 0.5 * x * (1.0 + jnp.tanh(
        math.sqrt(2.0 / math.pi) * (x + 0.044715 * x * x * x)))


def _layer_norm(x, g, b):
    mu = jnp.mean(x, axis=-1, keepdims=True)
    var = jnp.mean(jnp.square(x - mu), axis=-1, keepdims=True)
    return (x - mu) * lax.rsqrt(var + LN_EPS) * g + b


# --------------------------------- fused kernel -------------------------------

def gpt2_fused_kernel(xs_ref, w_in_ref, b_in_ref, wpe_ref,
                      ln1g_ref, ln1b_ref, wqkv_ref, bqkv_ref, wpr_ref, bpr_ref,
                      ln2g_ref, ln2b_ref, wfc_ref, bfc_ref, wp2_ref, bp2_ref,
                      lnfg_ref, lnfb_ref, wout_ref, bout_ref,
                      o_ref,
                      h_ref, attn_ref, mask_ref,
                      *, n_head, seq, mlp_chunk):
    l = pl.program_id(1)
    n_layer = pl.num_programs(1)
    BT, E = h_ref.shape
    T = seq
    Bt = BT // T                       # batch rows in this tile
    H = n_head
    hd = E // H
    scale = 1.0 / math.sqrt(hd)

    # -- first layer step of each batch tile: read_in + position embedding, and
    #    the (T, T) additive causal mask reused by every layer of this tile ----
    @pl.when(l == 0)
    def _embed():
        x0 = xs_ref[0]                                              # (BT, D) f32
        # read_in kept in f32 (tiny matmul; avoids bf16 rounding on raw inputs)
        emb = jnp.dot(x0, w_in_ref[...],
                      preferred_element_type=jnp.float32) + b_in_ref[...]
        emb = emb.reshape(Bt, T, E) + wpe_ref[...].astype(jnp.float32)[None]
        h_ref[...] = emb.reshape(BT, E)
        rows = lax.broadcasted_iota(jnp.int32, (T, T), 0)
        cols = lax.broadcasted_iota(jnp.int32, (T, T), 1)
        mask_ref[...] = jnp.where(cols <= rows, 0.0, -1e30).astype(jnp.float32)

    x = h_ref[...]                                                  # (BT, E) f32 residual

    # ---------------- causal multi-head self-attention (pre-LN) ----------------
    xn = _layer_norm(x, ln1g_ref[0], ln1b_ref[0])
    qkv = (jnp.dot(xn.astype(wqkv_ref.dtype), wqkv_ref[0],
                   preferred_element_type=jnp.float32) + bqkv_ref[0])  # (BT, 3E)
    # fold 1/sqrt(hd) into q once (B*T*E mults) instead of scaling B*H*T*T scores
    q = (qkv[:, 0 * E:1 * E] * scale).reshape(Bt, T, E)
    k = qkv[:, 1 * E:2 * E].reshape(Bt, T, E)
    v = qkv[:, 2 * E:3 * E].reshape(Bt, T, E)
    mask = mask_ref[...][None]                                      # (1, T, T) additive

    for h in range(H):                 # per head, batched over Bt; no concat at the end
        sl = slice(h * hd, (h + 1) * hd)
        qh = q[:, :, sl].astype(jnp.bfloat16)
        kh = k[:, :, sl].astype(jnp.bfloat16)
        vh = v[:, :, sl].astype(jnp.bfloat16)
        s = jnp.einsum('bqd,bkd->bqk', qh, kh,
                       preferred_element_type=jnp.float32) + mask   # f32 scores
        p = jnp.exp(s - jnp.max(s, axis=-1, keepdims=True))
        # approx reciprocal (EUP); set approx=False for exact softmax bit-match
        p = p * pl.reciprocal(jnp.sum(p, axis=-1, keepdims=True), approx=True)
        ctx = jnp.einsum('bqk,bkd->bqd', p.astype(jnp.bfloat16), vh,
                         preferred_element_type=jnp.float32)
        attn_ref[:, sl] = ctx.reshape(BT, hd)   # write head slice directly to scratch

    attn = (jnp.dot(attn_ref[...].astype(wpr_ref.dtype), wpr_ref[0],
                    preferred_element_type=jnp.float32) + bpr_ref[0])
    x = x + attn

    # ------------------------------ MLP (pre-LN) ------------------------------
    xn2 = _layer_norm(x, ln2g_ref[0], ln2b_ref[0]).astype(wfc_ref.dtype)
    F4 = wfc_ref.shape[-1]                         # 4 * E
    acc = jnp.zeros((BT, E), jnp.float32)
    for c in range(F4 // mlp_chunk):               # chunk 4E: only a (BT, chunk) hid live
        lo = c * mlp_chunk
        hid = (jnp.dot(xn2, wfc_ref[0, :, lo:lo + mlp_chunk],
                       preferred_element_type=jnp.float32)
               + bfc_ref[0, :, lo:lo + mlp_chunk])
        hid = _gelu_new(hid)                       # gelu stays f32 (no bf16 VPU work)
        acc = acc + jnp.dot(hid.astype(wp2_ref.dtype),
                            wp2_ref[0, lo:lo + mlp_chunk, :],
                            preferred_element_type=jnp.float32)
    x = x + acc + bp2_ref[0]
    h_ref[...] = x

    # --------- ln_f + read_out on the last layer step, lane-dense output -------
    @pl.when(l == n_layer - 1)
    def _head():
        xf = _layer_norm(x, lnfg_ref[...], lnfb_ref[...])           # (BT, E) f32
        # (1,E) . (BT,E)^T -> (1, BT): keeps the store lane-dense (no width-1 lane dim)
        lg = jnp.einsum('oe,ne->on', wout_ref[...].astype(jnp.float32), xf,
                        preferred_element_type=jnp.float32)
        o_ref[0] = lg + bout_ref[...]


# ------------------------------ pallas wrapper --------------------------------

def _resident(shape):
    nd = len(shape)
    return pl.BlockSpec(tuple(shape), lambda b, l, _nd=nd: (0,) * _nd)


def _per_layer(shape):
    blk = (1,) + tuple(shape[1:])
    nz = len(shape) - 1
    return pl.BlockSpec(blk, lambda b, l, _nz=nz: (l,) + (0,) * _nz)


_PER_LAYER_NAMES = ("ln1_g", "ln1_b", "w_qkv", "b_qkv", "w_aproj", "b_aproj",
                    "ln2_g", "ln2_b", "w_fc", "b_fc", "w_mproj", "b_mproj")


def _vmem_limit_bytes():
    # Raise the scoped VMEM limit toward physical capacity (128 MiB v5e/v6e, 64 MiB v7x)
    # so real-size per-layer weights + intermediates fit without retiling on v6e/v5e.
    try:
        cap = int(pltpu.get_tpu_info().vmem_capacity_bytes)
        return min(int(cap * 0.85), 110 * 1024 * 1024)
    except Exception:
        return None


def transformer_forward(xs, params, n_head, b_tile=1):
    """Equivalent of TransformerModel.forward(xs) default path -> logits (B, T, 1)."""
    B, T, D = xs.shape
    E = params["w_in"].shape[1]
    L = params["w_qkv"].shape[0]
    assert E % n_head == 0
    assert B % b_tile == 0
    n_tiles = B // b_tile
    BT = b_tile * T                      # rows per tile (fold tile-batch into matmul M)
    # NOTE: at production sizes pick BT / N dims as multiples of 256 (v6e/v7x MXU)
    # or 128 (v5e); pad B*T if necessary for full MXU occupancy.

    F4 = params["w_fc"].shape[-1]
    mlp_chunk = F4 if F4 <= 512 else 512
    if F4 % mlp_chunk:
        mlp_chunk = F4

    xs3 = xs.reshape(n_tiles, BT, D)     # whole-sequence batch tiles

    inputs = [xs3, params["w_in"], params["b_in"], params["wpe"]]
    in_specs = [pl.BlockSpec((1, BT, D), lambda b, l: (b, 0, 0)),
                _resident(params["w_in"].shape),
                _resident(params["b_in"].shape),
                _resident(params["wpe"].shape)]
    for name in _PER_LAYER_NAMES:
        inputs.append(params[name])
        in_specs.append(_per_layer(params[name].shape))
    for name in ("lnf_g", "lnf_b", "w_out", "b_out"):
        inputs.append(params[name])
        in_specs.append(_resident(params[name].shape))

    out = pl.pallas_call(
        functools.partial(gpt2_fused_kernel, n_head=n_head, seq=T,
                          mlp_chunk=mlp_chunk),
        out_shape=jax.ShapeDtypeStruct((n_tiles, 1, BT), jnp.float32),
        grid=(n_tiles, L),
        in_specs=in_specs,
        out_specs=pl.BlockSpec((1, 1, BT), lambda b, l: (b, 0, 0)),
        scratch_shapes=[pltpu.VMEM((BT, E), jnp.float32),     # residual stream
                        pltpu.VMEM((BT, E), jnp.float32),     # per-head context slab
                        pltpu.VMEM((T, T), jnp.float32)],     # additive causal mask
        compiler_params=pltpu.CompilerParams(
            # batch-tile axis parallel (megacore on v7x), layer axis sequential
            dimension_semantics=("parallel", "arbitrary"),
            vmem_limit_bytes=_vmem_limit_bytes()),
        # Default 2-deep weight buffering; bump to pl.Buffered(3) on the per-layer
        # weight specs only if profiling shows the weight DMA exposed at small BT.
    )(*inputs)
    return out.reshape(B, T)[:, :, None]


# ------------------------------- parameter init --------------------------------

def init_params(key, n_dims, n_positions, n_embd, n_layer, seq_len):
    std = 0.02
    ks = jax.random.split(key, 7)
    E, L = n_embd, n_layer

    def nrm(k, shape):
        return std * jax.random.normal(k, shape, jnp.float32)

    params = {
        # read_in weight kept f32 (tiny matmul, avoids bf16 rounding on raw inputs)
        "w_in": nrm(ks[0], (n_dims, E)),
        "b_in": jnp.zeros((1, E), jnp.float32),
        # wpe nominally (2*n_positions, E); only the first seq_len rows are used.
        # Stored bf16 (always-resident input; trims VMEM on v7x).
        "wpe": nrm(ks[1], (2 * n_positions, E))[:seq_len].astype(jnp.bfloat16),
        "lnf_g": jnp.ones((1, E), jnp.float32),
        "lnf_b": jnp.zeros((1, E), jnp.float32),
        # read_out weight stored as a (1, E) row (lane-dense head output)
        "w_out": nrm(ks[2], (1, E)).astype(jnp.bfloat16),
        "b_out": jnp.zeros((1, 1), jnp.float32),
        # per-layer params stacked along a leading layer dim; matmul weights bf16
        # (f32 accumulation inside the kernel)
        "ln1_g": jnp.ones((L, 1, E), jnp.float32),
        "ln1_b": jnp.zeros((L, 1, E), jnp.float32),
        "w_qkv": nrm(ks[3], (L, E, 3 * E)).astype(jnp.bfloat16),
        "b_qkv": jnp.zeros((L, 1, 3 * E), jnp.float32),
        "w_aproj": nrm(ks[4], (L, E, E)).astype(jnp.bfloat16),
        "b_aproj": jnp.zeros((L, 1, E), jnp.float32),
        "ln2_g": jnp.ones((L, 1, E), jnp.float32),
        "ln2_b": jnp.zeros((L, 1, E), jnp.float32),
        "w_fc": nrm(ks[5], (L, E, 4 * E)).astype(jnp.bfloat16),
        "b_fc": jnp.zeros((L, 1, 4 * E), jnp.float32),
        "w_mproj": nrm(ks[6], (L, 4 * E, E)).astype(jnp.bfloat16),
        "b_mproj": jnp.zeros((L, 1, E), jnp.float32),
    }
    return params


# ------------------------------------ main --------------------------------------

if __name__ == "__main__":
    # Small shapes consistent with the module's forward:
    B, T = 2, 8                    # batch, sequence length (<= 2*n_positions)
    n_dims, n_positions = 4, 8
    n_embd, n_layer, n_head = 32, 2, 4

    key = jax.random.PRNGKey(0)
    k_param, k_x = jax.random.split(key)
    params = init_params(k_param, n_dims, n_positions, n_embd, n_layer, T)
    xs = jax.random.normal(k_x, (B, T, n_dims), jnp.float32)

    logits = transformer_forward(xs, params, n_head, b_tile=1)
    logits = jax.block_until_ready(logits)
    assert logits.shape == (B, T, 1), logits.shape
    assert bool(jnp.all(jnp.isfinite(logits)))
    # TODO(synk): model-variant recomposition / post_eval / targets-MSE-loss branches
    # are training/analysis-time plumbing and are not part of this kernel.
    print("KERNEL_OK")
</pallas_src>

<mosaic_0001>
module attributes {stable_mosaic.version = 11 : i64} {
  func.func @gpt2_fused_kernel(%arg0: i32, %arg1: i32, %arg2: memref<1x8x4xf32, #tpu.memory_space<vmem>>, %arg3: memref<4x32xf32, #tpu.memory_space<vmem>>, %arg4: memref<1x32xf32, #tpu.memory_space<vmem>>, %arg5: memref<8x32xbf16, #tpu.memory_space<vmem>>, %arg6: memref<1x1x32xf32, #tpu.memory_space<vmem>>, %arg7: memref<1x1x32xf32, #tpu.memory_space<vmem>>, %arg8: memref<1x32x96xbf16, #tpu.memory_space<vmem>>, %arg9: memref<1x1x96xf32, #tpu.memory_space<vmem>>, %arg10: memref<1x32x32xbf16, #tpu.memory_space<vmem>>, %arg11: memref<1x1x32xf32, #tpu.memory_space<vmem>>, %arg12: memref<1x1x32xf32, #tpu.memory_space<vmem>>, %arg13: memref<1x1x32xf32, #tpu.memory_space<vmem>>, %arg14: memref<1x32x128xbf16, #tpu.memory_space<vmem>>, %arg15: memref<1x1x128xf32, #tpu.memory_space<vmem>>, %arg16: memref<1x128x32xbf16, #tpu.memory_space<vmem>>, %arg17: memref<1x1x32xf32, #tpu.memory_space<vmem>>, %arg18: memref<1x32xf32, #tpu.memory_space<vmem>>, %arg19: memref<1x32xf32, #tpu.memory_space<vmem>>, %arg20: memref<1x32xbf16, #tpu.memory_space<vmem>>, %arg21: memref<1x1xf32, #tpu.memory_space<vmem>>, %arg22: memref<1x1x8xf32, #tpu.memory_space<vmem>>, %arg23: memref<8x32xf32, #tpu.memory_space<vmem>>, %arg24: memref<8x32xf32, #tpu.memory_space<vmem>>, %arg25: memref<8x8xf32, #tpu.memory_space<vmem>>) attributes {dimension_semantics = [#tpu.dimension_semantics<parallel>, #tpu.dimension_semantics<arbitrary>], iteration_bounds = array<i64: 2, 2>, scalar_prefetch = 0 : i64, scratch_operands = 3 : i64, tpu.core_type = #tpu.core_type<tc>, window_params = [{transform_indices = @transform_0, window_bounds = array<i64: 1, 8, 4>}, {pipeline_mode = #tpu.pipeline_mode<synchronous>, transform_indices = @transform_1, window_bounds = array<i64: 4, 32>}, {pipeline_mode = #tpu.pipeline_mode<synchronous>, transform_indices = @transform_2, window_bounds = array<i64: 1, 32>}, {pipeline_mode = #tpu.pipeline_mode<synchronous>, transform_indices = @transform_3, window_bounds = array<i64: 8, 32>}, {transform_indices = @transform_4, window_bounds = array<i64: 1, 1, 32>}, {transform_indices = @transform_5, window_bounds = array<i64: 1, 1, 32>}, {transform_indices = @transform_6, window_bounds = array<i64: 1, 32, 96>}, {transform_indices = @transform_7, window_bounds = array<i64: 1, 1, 96>}, {transform_indices = @transform_8, window_bounds = array<i64: 1, 32, 32>}, {transform_indices = @transform_9, window_bounds = array<i64: 1, 1, 32>}, {transform_indices = @transform_10, window_bounds = array<i64: 1, 1, 32>}, {transform_indices = @transform_11, window_bounds = array<i64: 1, 1, 32>}, {transform_indices = @transform_12, window_bounds = array<i64: 1, 32, 128>}, {transform_indices = @transform_13, window_bounds = array<i64: 1, 1, 128>}, {transform_indices = @transform_14, window_bounds = array<i64: 1, 128, 32>}, {transform_indices = @transform_15, window_bounds = array<i64: 1, 1, 32>}, {pipeline_mode = #tpu.pipeline_mode<synchronous>, transform_indices = @transform_16, window_bounds = array<i64: 1, 32>}, {pipeline_mode = #tpu.pipeline_mode<synchronous>, transform_indices = @transform_17, window_bounds = array<i64: 1, 32>}, {pipeline_mode = #tpu.pipeline_mode<synchronous>, transform_indices = @transform_18, window_bounds = array<i64: 1, 32>}, {pipeline_mode = #tpu.pipeline_mode<synchronous>, transform_indices = @transform_19, window_bounds = array<i64: 1, 1>}, {transform_indices = @transform_20, window_bounds = array<i64: 1, 1, 8>}]} {
    %c0_i32 = arith.constant 0 : i32
    %0 = arith.cmpi eq, %arg1, %c0_i32 : i32
    %1 = arith.extui %0 : i1 to i32
    %c0_i32_0 = arith.constant 0 : i32
    %2 = arith.cmpi ne, %1, %c0_i32_0 : i32
    scf.if %2 {
      %c0_85 = arith.constant 0 : index
      %c0_86 = arith.constant 0 : index
      %c0_87 = arith.constant 0 : index
      %208 = vector.load %arg2[%c0_85, %c0_86, %c0_87] : memref<1x8x4xf32, #tpu.memory_space<vmem>>, vector<1x8x4xf32>
      %209 = vector.shape_cast %208 : vector<1x8x4xf32> to vector<8x4xf32>
      %c0_88 = arith.constant 0 : index
      %c0_89 = arith.constant 0 : index
      %210 = vector.load %arg3[%c0_88, %c0_89] : memref<4x32xf32, #tpu.memory_space<vmem>>, vector<4x32xf32>
      %cst_90 = arith.constant dense<0.000000e+00> : vector<8x32xf32>
      %211 = tpu.matmul %209, %210, %cst_90 {dimension_numbers = #tpu.dot_dimension_numbers<[1], [0], [0], [1], [0, 0, 1, 1], [], []>} : vector<8x4xf32>, vector<4x32xf32>, vector<8x32xf32> -> vector<8x32xf32>
      %c0_91 = arith.constant 0 : index
      %c0_92 = arith.constant 0 : index
      %212 = vector.load %arg4[%c0_91, %c0_92] : memref<1x32xf32, #tpu.memory_space<vmem>>, vector<1x32xf32>
      %213 = vector.broadcast %212 : vector<1x32xf32> to vector<8x32xf32>
      %214 = arith.addf %211, %213 : vector<8x32xf32>
      %215 = vector.shape_cast %214 : vector<8x32xf32> to vector<1x8x32xf32>
      %c0_93 = arith.constant 0 : index
      %c0_94 = arith.constant 0 : index
      %216 = vector.load %arg5[%c0_93, %c0_94] : memref<8x32xbf16, #tpu.memory_space<vmem>>, vector<8x32xbf16>
      %217 = arith.extf %216 : vector<8x32xbf16> to vector<8x32xf32>
      %218 = vector.shape_cast %217 : vector<8x32xf32> to vector<1x8x32xf32>
      %219 = arith.addf %215, %218 : vector<1x8x32xf32>
      %220 = vector.shape_cast %219 : vector<1x8x32xf32> to vector<8x32xf32>
      %c0_95 = arith.constant 0 : index
      %c0_96 = arith.constant 0 : index
      %221 = vector.load %arg23[%c0_95, %c0_96] : memref<8x32xf32, #tpu.memory_space<vmem>>, vector<8x32xf32>
      tpu.vector_store %arg23[%c0_95, %c0_96], %220 {strides = array<i32>} : memref<8x32xf32, #tpu.memory_space<vmem>>, vector<8x32xf32>,
      %222 = tpu.iota {dimensions = array<i32: 0>} : vector<8x8xi32>
      %223 = tpu.iota {dimensions = array<i32: 1>} : vector<8x8xi32>
      %224 = arith.cmpi sle, %223, %222 : vector<8x8xi32>
      %cst_97 = arith.constant 0.000000e+00 : f32
      %cst_98 = arith.constant -1.000000e+30 : f32
      %225 = vector.broadcast %cst_97 : f32 to vector<8x8xf32>
      %226 = vector.broadcast %cst_98 : f32 to vector<8x8xf32>
      %227 = arith.select %224, %225, %226 : vector<8x8xi1>, vector<8x8xf32>
      %c0_99 = arith.constant 0 : index
      %c0_100 = arith.constant 0 : index
      %228 = vector.load %arg25[%c0_99, %c0_100] : memref<8x8xf32, #tpu.memory_space<vmem>>, vector<8x8xf32>
      tpu.vector_store %arg25[%c0_99, %c0_100], %227 {strides = array<i32>} : memref<8x8xf32, #tpu.memory_space<vmem>>, vector<8x8xf32>,
    } else {
    }
    %c0 = arith.constant 0 : index
    %c0_1 = arith.constant 0 : index
    %3 = vector.load %arg23[%c0, %c0_1] : memref<8x32xf32, #tpu.memory_space<vmem>>, vector<8x32xf32>
    %c0_2 = arith.constant 0 : index
    %c0_3 = arith.constant 0 : index
    %c0_4 = arith.constant 0 : index
    %4 = vector.load %arg6[%c0_2, %c0_3, %c0_4] : memref<1x1x32xf32, #tpu.memory_space<vmem>>, vector<1x1x32xf32>
    %5 = vector.shape_cast %4 : vector<1x1x32xf32> to vector<1x32xf32>
    %c0_5 = arith.constant 0 : index
    %c0_6 = arith.constant 0 : index
    %c0_7 = arith.constant 0 : index
    %6 = vector.load %arg7[%c0_5, %c0_6, %c0_7] : memref<1x1x32xf32, #tpu.memory_space<vmem>>, vector<1x1x32xf32>
    %7 = vector.shape_cast %6 : vector<1x1x32xf32> to vector<1x32xf32>
    %cst = arith.constant dense<0.000000e+00> : vector<8xf32>
    %8 = vector.multi_reduction <add>, %3, %cst [1] : vector<8x32xf32> to vector<8xf32>
    %9 = vector.shape_cast %8 : vector<8xf32> to vector<8x1xf32>
    %cst_8 = arith.constant 3.200000e+01 : f32
    %10 = vector.broadcast %cst_8 : f32 to vector<8x1xf32>
    %11 = arith.divf %9, %10 : vector<8x1xf32>
    %12 = vector.broadcast %11 : vector<8x1xf32> to vector<8x32xf32>
    %13 = arith.subf %3, %12 : vector<8x32xf32>
    %14 = arith.mulf %13, %13 : vector<8x32xf32>
    %cst_9 = arith.constant dense<0.000000e+00> : vector<8xf32>
    %15 = vector.multi_reduction <add>, %14, %cst_9 [1] : vector<8x32xf32> to vector<8xf32>
    %16 = vector.shape_cast %15 : vector<8xf32> to vector<8x1xf32>
    %cst_10 = arith.constant 3.200000e+01 : f32
    %17 = vector.broadcast %cst_10 : f32 to vector<8x1xf32>
    %18 = arith.divf %16, %17 : vector<8x1xf32>
    %19 = vector.broadcast %11 : vector<8x1xf32> to vector<8x32xf32>
    %20 = arith.subf %3, %19 : vector<8x32xf32>
    %cst_11 = arith.constant 9.99999974E-6 : f32
    %21 = vector.broadcast %cst_11 : f32 to vector<8x1xf32>
    %22 = arith.addf %18, %21 : vector<8x1xf32>
    %23 = math.rsqrt %22 : vector<8x1xf32>
    %24 = vector.broadcast %23 : vector<8x1xf32> to vector<8x32xf32>
    %25 = arith.mulf %20, %24 : vector<8x32xf32>
    %26 = vector.broadcast %5 : vector<1x32xf32> to vector<8x32xf32>
    %27 = arith.mulf %25, %26 : vector<8x32xf32>
    %28 = vector.broadcast %7 : vector<1x32xf32> to vector<8x32xf32>
    %29 = arith.addf %27, %28 : vector<8x32xf32>
    %30 = arith.truncf %29 : vector<8x32xf32> to vector<8x32xbf16>
    %c0_12 = arith.constant 0 : index
    %c0_13 = arith.constant 0 : index
    %c0_14 = arith.constant 0 : index
    %31 = vector.load %arg8[%c0_12, %c0_13, %c0_14] : memref<1x32x96xbf16, #tpu.memory_space<vmem>>, vector<1x32x96xbf16>
    %32 = vector.shape_cast %31 : vector<1x32x96xbf16> to vector<32x96xbf16>
    %cst_15 = arith.constant dense<0.000000e+00> : vector<8x96xf32>
    %33 = tpu.matmul %30, %32, %cst_15 {dimension_numbers = #tpu.dot_dimension_numbers<[1], [0], [0], [1], [0, 0, 1, 1], [], []>} : vector<8x32xbf16>, vector<32x96xbf16>, vector<8x96xf32> -> vector<8x96xf32>
    %c0_16 = arith.constant 0 : index
    %c0_17 = arith.constant 0 : index
    %c0_18 = arith.constant 0 : index
    %34 = vector.load %arg9[%c0_16, %c0_17, %c0_18] : memref<1x1x96xf32, #tpu.memory_space<vmem>>, vector<1x1x96xf32>
    %35 = vector.shape_cast %34 : vector<1x1x96xf32> to vector<1x96xf32>
    %36 = vector.broadcast %35 : vector<1x96xf32> to vector<8x96xf32>
    %37 = arith.addf %33, %36 : vector<8x96xf32>
    %38 = vector.extract_strided_slice %37 {offsets = [0, 0], sizes = [8, 32], strides = [1, 1]} : vector<8x96xf32> to vector<8x32xf32>
    %cst_19 = arith.constant 0.353553385 : f32
    %39 = vector.broadcast %cst_19 : f32 to vector<8x32xf32>
    %40 = arith.mulf %38, %39 : vector<8x32xf32>
    %41 = vector.shape_cast %40 : vector<8x32xf32> to vector<1x8x32xf32>
    %42 = vector.extract_strided_slice %37 {offsets = [0, 32], sizes = [8, 32], strides = [1, 1]} : vector<8x96xf32> to vector<8x32xf32>
    %43 = vector.shape_cast %42 : vector<8x32xf32> to vector<1x8x32xf32>
    %44 = vector.extract_strided_slice %37 {offsets = [0, 64], sizes = [8, 32], strides = [1, 1]} : vector<8x96xf32> to vector<8x32xf32>
    %45 = vector.shape_cast %44 : vector<8x32xf32> to vector<1x8x32xf32>
    %c0_20 = arith.constant 0 : index
    %c0_21 = arith.constant 0 : index
    %46 = vector.load %arg25[%c0_20, %c0_21] : memref<8x8xf32, #tpu.memory_space<vmem>>, vector<8x8xf32>
    %47 = vector.shape_cast %46 : vector<8x8xf32> to vector<1x8x8xf32>
    %48 = vector.extract_strided_slice %41 {offsets = [0, 0, 0], sizes = [1, 8, 8], strides = [1, 1, 1]} : vector<1x8x32xf32> to vector<1x8x8xf32>
    %49 = arith.truncf %48 : vector<1x8x8xf32> to vector<1x8x8xbf16>
    %50 = vector.extract_strided_slice %43 {offsets = [0, 0, 0], sizes = [1, 8, 8], strides = [1, 1, 1]} : vector<1x8x32xf32> to vector<1x8x8xf32>
    %51 = arith.truncf %50 : vector<1x8x8xf32> to vector<1x8x8xbf16>
    %52 = vector.extract_strided_slice %45 {offsets = [0, 0, 0], sizes = [1, 8, 8], strides = [1, 1, 1]} : vector<1x8x32xf32> to vector<1x8x8xf32>
    %53 = arith.truncf %52 : vector<1x8x8xf32> to vector<1x8x8xbf16>
    "tpu.trace_start"() <{level = 10 : i32, message = "bqd,bkd->bqk"}> : () -> ()
    %cst_22 = arith.constant dense<0.000000e+00> : vector<1x8x8xf32>
    %54 = tpu.matmul %49, %51, %cst_22 {dimension_numbers = #tpu.dot_dimension_numbers<[2], [2], [1], [1], [0, 0, 0, 1, 1, 1], [0], [0]>} : vector<1x8x8xbf16>, vector<1x8x8xbf16>, vector<1x8x8xf32> -> vector<1x8x8xf32>
    "tpu.trace_stop"() : () -> ()
    %55 = arith.addf %54, %47 : vector<1x8x8xf32>
    %cst_23 = arith.constant dense<0xFF800000> : vector<1x8xf32>
    %56 = vector.multi_reduction <maximumf>, %55, %cst_23 [2] : vector<1x8x8xf32> to vector<1x8xf32>
    %57 = vector.shape_cast %56 : vector<1x8xf32> to vector<1x8x1xf32>
    %58 = vector.broadcast %57 : vector<1x8x1xf32> to vector<1x8x8xf32>
    %59 = arith.subf %55, %58 : vector<1x8x8xf32>
    %60 = math.exp %59 : vector<1x8x8xf32>
    %cst_24 = arith.constant dense<0.000000e+00> : vector<1x8xf32>
    %61 = vector.multi_reduction <add>, %60, %cst_24 [2] : vector<1x8x8xf32> to vector<1x8xf32>
    %62 = vector.shape_cast %61 : vector<1x8xf32> to vector<1x8x1xf32>
    %63 = tpu.reciprocal %62 {approx = true} : vector<1x8x1xf32> -> vector<1x8x1xf32>
    %64 = vector.broadcast %63 : vector<1x8x1xf32> to vector<1x8x8xf32>
    %65 = arith.mulf %60, %64 : vector<1x8x8xf32>
    %66 = arith.truncf %65 : vector<1x8x8xf32> to vector<1x8x8xbf16>
    "tpu.trace_start"() <{level = 10 : i32, message = "bqk,bkd->bqd"}> : () -> ()
    %cst_25 = arith.constant dense<0.000000e+00> : vector<1x8x8xf32>
    %67 = tpu.matmul %66, %53, %cst_25 {dimension_numbers = #tpu.dot_dimension_numbers<[2], [1], [1], [2], [0, 0, 0, 1, 1, 2], [0], [0]>} : vector<1x8x8xbf16>, vector<1x8x8xbf16>, vector<1x8x8xf32> -> vector<1x8x8xf32>
    "tpu.trace_stop"() : () -> ()
    %68 = vector.shape_cast %67 : vector<1x8x8xf32> to vector<8x8xf32>
    %c0_26 = arith.constant 0 : index
    %c0_27 = arith.constant 0 : index
    %69 = vector.load %arg24[%c0_26, %c0_27] : memref<8x32xf32, #tpu.memory_space<vmem>>, vector<8x8xf32>
    tpu.vector_store %arg24[%c0_26, %c0_27], %68 {strides = array<i32>} : memref<8x32xf32, #tpu.memory_space<vmem>>, vector<8x8xf32>,
    %70 = vector.extract_strided_slice %41 {offsets = [0, 0, 8], sizes = [1, 8, 8], strides = [1, 1, 1]} : vector<1x8x32xf32> to vector<1x8x8xf32>
    %71 = arith.truncf %70 : vector<1x8x8xf32> to vector<1x8x8xbf16>
    %72 = vector.extract_strided_slice %43 {offsets = [0, 0, 8], sizes = [1, 8, 8], strides = [1, 1, 1]} : vector<1x8x32xf32> to vector<1x8x8xf32>
    %73 = arith.truncf %72 : vector<1x8x8xf32> to vector<1x8x8xbf16>
    %74 = vector.extract_strided_slice %45 {offsets = [0, 0, 8], sizes = [1, 8, 8], strides = [1, 1, 1]} : vector<1x8x32xf32> to vector<1x8x8xf32>
    %75 = arith.truncf %74 : vector<1x8x8xf32> to vector<1x8x8xbf16>
    "tpu.trace_start"() <{level = 10 : i32, message = "bqd,bkd->bqk"}> : () -> ()
    %cst_28 = arith.constant dense<0.000000e+00> : vector<1x8x8xf32>
    %76 = tpu.matmul %71, %73, %cst_28 {dimension_numbers = #tpu.dot_dimension_numbers<[2], [2], [1], [1], [0, 0, 0, 1, 1, 1], [0], [0]>} : vector<1x8x8xbf16>, vector<1x8x8xbf16>, vector<1x8x8xf32> -> vector<1x8x8xf32>
    "tpu.trace_stop"() : () -> ()
    %77 = arith.addf %76, %47 : vector<1x8x8xf32>
    %cst_29 = arith.constant dense<0xFF800000> : vector<1x8xf32>
    %78 = vector.multi_reduction <maximumf>, %77, %cst_29 [2] : vector<1x8x8xf32> to vector<1x8xf32>
    %79 = vector.shape_cast %78 : vector<1x8xf32> to vector<1x8x1xf32>
    %80 = vector.broadcast %79 : vector<1x8x1xf32> to vector<1x8x8xf32>
    %81 = arith.subf %77, %80 : vector<1x8x8xf32>
    %82 = math.exp %81 : vector<1x8x8xf32>
    %cst_30 = arith.constant dense<0.000000e+00> : vector<1x8xf32>
    %83 = vector.multi_reduction <add>, %82, %cst_30 [2] : vector<1x8x8xf32> to vector<1x8xf32>
    %84 = vector.shape_cast %83 : vector<1x8xf32> to vector<1x8x1xf32>
    %85 = tpu.reciprocal %84 {approx = true} : vector<1x8x1xf32> -> vector<1x8x1xf32>
    %86 = vector.broadcast %85 : vector<1x8x1xf32> to vector<1x8x8xf32>
    %87 = arith.mulf %82, %86 : vector<1x8x8xf32>
    %88 = arith.truncf %87 : vector<1x8x8xf32> to vector<1x8x8xbf16>
    "tpu.trace_start"() <{level = 10 : i32, message = "bqk,bkd->bqd"}> : () -> ()
    %cst_31 = arith.constant dense<0.000000e+00> : vector<1x8x8xf32>
    %89 = tpu.matmul %88, %75, %cst_31 {dimension_numbers = #tpu.dot_dimension_numbers<[2], [1], [1], [2], [0, 0, 0, 1, 1, 2], [0], [0]>} : vector<1x8x8xbf16>, vector<1x8x8xbf16>, vector<1x8x8xf32> -> vector<1x8x8xf32>
    "tpu.trace_stop"() : () -> ()
    %90 = vector.shape_cast %89 : vector<1x8x8xf32> to vector<8x8xf32>
    %c0_32 = arith.constant 0 : index
    %c8 = arith.constant 8 : index
    %91 = vector.load %arg24[%c0_32, %c8] : memref<8x32xf32, #tpu.memory_space<vmem>>, vector<8x8xf32>
    tpu.vector_store %arg24[%c0_32, %c8], %90 {strides = array<i32>} : memref<8x32xf32, #tpu.memory_space<vmem>>, vector<8x8xf32>,
    %92 = vector.extract_strided_slice %41 {offsets = [0, 0, 16], sizes = [1, 8, 8], strides = [1, 1, 1]} : vector<1x8x32xf32> to vector<1x8x8xf32>
    %93 = arith.truncf %92 : vector<1x8x8xf32> to vector<1x8x8xbf16>
    %94 = vector.extract_strided_slice %43 {offsets = [0, 0, 16], sizes = [1, 8, 8], strides = [1, 1, 1]} : vector<1x8x32xf32> to vector<1x8x8xf32>
    %95 = arith.truncf %94 : vector<1x8x8xf32> to vector<1x8x8xbf16>
    %96 = vector.extract_strided_slice %45 {offsets = [0, 0, 16], sizes = [1, 8, 8], strides = [1, 1, 1]} : vector<1x8x32xf32> to vector<1x8x8xf32>
    %97 = arith.truncf %96 : vector<1x8x8xf32> to vector<1x8x8xbf16>
    "tpu.trace_start"() <{level = 10 : i32, message = "bqd,bkd->bqk"}> : () -> ()
    %cst_33 = arith.constant dense<0.000000e+00> : vector<1x8x8xf32>
    %98 = tpu.matmul %93, %95, %cst_33 {dimension_numbers = #tpu.dot_dimension_numbers<[2], [2], [1], [1], [0, 0, 0, 1, 1, 1], [0], [0]>} : vector<1x8x8xbf16>, vector<1x8x8xbf16>, vector<1x8x8xf32> -> vector<1x8x8xf32>
    "tpu.trace_stop"() : () -> ()
    %99 = arith.addf %98, %47 : vector<1x8x8xf32>
    %cst_34 = arith.constant dense<0xFF800000> : vector<1x8xf32>
    %100 = vector.multi_reduction <maximumf>, %99, %cst_34 [2] : vector<1x8x8xf32> to vector<1x8xf32>
    %101 = vector.shape_cast %100 : vector<1x8xf32> to vector<1x8x1xf32>
    %102 = vector.broadcast %101 : vector<1x8x1xf32> to vector<1x8x8xf32>
    %103 = arith.subf %99, %102 : vector<1x8x8xf32>
    %104 = math.exp %103 : vector<1x8x8xf32>
    %cst_35 = arith.constant dense<0.000000e+00> : vector<1x8xf32>
    %105 = vector.multi_reduction <add>, %104, %cst_35 [2] : vector<1x8x8xf32> to vector<1x8xf32>
    %106 = vector.shape_cast %105 : vector<1x8xf32> to vector<1x8x1xf32>
    %107 = tpu.reciprocal %106 {approx = true} : vector<1x8x1xf32> -> vector<1x8x1xf32>
    %108 = vector.broadcast %107 : vector<1x8x1xf32> to vector<1x8x8xf32>
    %109 = arith.mulf %104, %108 : vector<1x8x8xf32>
    %110 = arith.truncf %109 : vector<1x8x8xf32> to vector<1x8x8xbf16>
    "tpu.trace_start"() <{level = 10 : i32, message = "bqk,bkd->bqd"}> : () -> ()
    %cst_36 = arith.constant dense<0.000000e+00> : vector<1x8x8xf32>
    %111 = tpu.matmul %110, %97, %cst_36 {dimension_numbers = #tpu.dot_dimension_numbers<[2], [1], [1], [2], [0, 0, 0, 1, 1, 2], [0], [0]>} : vector<1x8x8xbf16>, vector<1x8x8xbf16>, vector<1x8x8xf32> -> vector<1x8x8xf32>
    "tpu.trace_stop"() : () -> ()
    %112 = vector.shape_cast %111 : vector<1x8x8xf32> to vector<8x8xf32>
    %c0_37 = arith.constant 0 : index
    %c16 = arith.constant 16 : index
    %113 = vector.load %arg24[%c0_37, %c16] : memref<8x32xf32, #tpu.memory_space<vmem>>, vector<8x8xf32>
    tpu.vector_store %arg24[%c0_37, %c16], %112 {strides = array<i32>} : memref<8x32xf32, #tpu.memory_space<vmem>>, vector<8x8xf32>,
    %114 = vector.extract_strided_slice %41 {offsets = [0, 0, 24], sizes = [1, 8, 8], strides = [1, 1, 1]} : vector<1x8x32xf32> to vector<1x8x8xf32>
    %115 = arith.truncf %114 : vector<1x8x8xf32> to vector<1x8x8xbf16>
    %116 = vector.extract_strided_slice %43 {offsets = [0, 0, 24], sizes = [1, 8, 8], strides = [1, 1, 1]} : vector<1x8x32xf32> to vector<1x8x8xf32>
    %117 = arith.truncf %116 : vector<1x8x8xf32> to vector<1x8x8xbf16>
    %118 = vector.extract_strided_slice %45 {offsets = [0, 0, 24], sizes = [1, 8, 8], strides = [1, 1, 1]} : vector<1x8x32xf32> to vector<1x8x8xf32>
    %119 = arith.truncf %118 : vector<1x8x8xf32> to vector<1x8x8xbf16>
    "tpu.trace_start"() <{level = 10 : i32, message = "bqd,bkd->bqk"}> : () -> ()
    %cst_38 = arith.constant dense<0.000000e+00> : vector<1x8x8xf32>
    %120 = tpu.matmul %115, %117, %cst_38 {dimension_numbers = #tpu.dot_dimension_numbers<[2], [2], [1], [1], [0, 0, 0, 1, 1, 1], [0], [0]>} : vector<1x8x8xbf16>, vector<1x8x8xbf16>, vector<1x8x8xf32> -> vector<1x8x8xf32>
    "tpu.trace_stop"() : () -> ()
    %121 = arith.addf %120, %47 : vector<1x8x8xf32>
    %cst_39 = arith.constant dense<0xFF800000> : vector<1x8xf32>
    %122 = vector.multi_reduction <maximumf>, %121, %cst_39 [2] : vector<1x8x8xf32> to vector<1x8xf32>
    %123 = vector.shape_cast %122 : vector<1x8xf32> to vector<1x8x1xf32>
    %124 = vector.broadcast %123 : vector<1x8x1xf32> to vector<1x8x8xf32>
    %125 = arith.subf %121, %124 : vector<1x8x8xf32>
    %126 = math.exp %125 : vector<1x8x8xf32>
    %cst_40 = arith.constant dense<0.000000e+00> : vector<1x8xf32>
    %127 = vector.multi_reduction <add>, %126, %cst_40 [2] : vector<1x8x8xf32> to vector<1x8xf32>
    %128 = vector.shape_cast %127 : vector<1x8xf32> to vector<1x8x1xf32>
    %129 = tpu.reciprocal %128 {approx = true} : vector<1x8x1xf32> -> vector<1x8x1xf32>
    %130 = vector.broadcast %129 : vector<1x8x1xf32> to vector<1x8x8xf32>
    %131 = arith.mulf %126, %130 : vector<1x8x8xf32>
    %132 = arith.truncf %131 : vector<1x8x8xf32> to vector<1x8x8xbf16>
    "tpu.trace_start"() <{level = 10 : i32, message = "bqk,bkd->bqd"}> : () -> ()
    %cst_41 = arith.constant dense<0.000000e+00> : vector<1x8x8xf32>
    %133 = tpu.matmul %132, %119, %cst_41 {dimension_numbers = #tpu.dot_dimension_numbers<[2], [1], [1], [2], [0, 0, 0, 1, 1, 2], [0], [0]>} : vector<1x8x8xbf16>, vector<1x8x8xbf16>, vector<1x8x8xf32> -> vector<1x8x8xf32>
    "tpu.trace_stop"() : () -> ()
    %134 = vector.shape_cast %133 : vector<1x8x8xf32> to vector<8x8xf32>
    %c0_42 = arith.constant 0 : index
    %c24 = arith.constant 24 : index
    %135 = vector.load %arg24[%c0_42, %c24] : memref<8x32xf32, #tpu.memory_space<vmem>>, vector<8x8xf32>
    tpu.vector_store %arg24[%c0_42, %c24], %134 {strides = array<i32>} : memref<8x32xf32, #tpu.memory_space<vmem>>, vector<8x8xf32>,
    %c0_43 = arith.constant 0 : index
    %c0_44 = arith.constant 0 : index
    %136 = vector.load %arg24[%c0_43, %c0_44] : memref<8x32xf32, #tpu.memory_space<vmem>>, vector<8x32xf32>
    %137 = arith.truncf %136 : vector<8x32xf32> to vector<8x32xbf16>
    %c0_45 = arith.constant 0 : index
    %c0_46 = arith.constant 0 : index
    %c0_47 = arith.constant 0 : index
    %138 = vector.load %arg10[%c0_45, %c0_46, %c0_47] : memref<1x32x32xbf16, #tpu.memory_space<vmem>>, vector<1x32x32xbf16>
    %139 = vector.shape_cast %138 : vector<1x32x32xbf16> to vector<32x32xbf16>
    %cst_48 = arith.constant dense<0.000000e+00> : vector<8x32xf32>
    %140 = tpu.matmul %137, %139, %cst_48 {dimension_numbers = #tpu.dot_dimension_numbers<[1], [0], [0], [1], [0, 0, 1, 1], [], []>} : vector<8x32xbf16>, vector<32x32xbf16>, vector<8x32xf32> -> vector<8x32xf32>
    %c0_49 = arith.constant 0 : index
    %c0_50 = arith.constant 0 : index
    %c0_51 = arith.constant 0 : index
    %141 = vector.load %arg11[%c0_49, %c0_50, %c0_51] : memref<1x1x32xf32, #tpu.memory_space<vmem>>, vector<1x1x32xf32>
    %142 = vector.shape_cast %141 : vector<1x1x32xf32> to vector<1x32xf32>
    %143 = vector.broadcast %142 : vector<1x32xf32> to vector<8x32xf32>
    %144 = arith.addf %140, %143 : vector<8x32xf32>
    %145 = arith.addf %3, %144 : vector<8x32xf32>
    %c0_52 = arith.constant 0 : index
    %c0_53 = arith.constant 0 : index
    %c0_54 = arith.constant 0 : index
    %146 = vector.load %arg12[%c0_52, %c0_53, %c0_54] : memref<1x1x32xf32, #tpu.memory_space<vmem>>, vector<1x1x32xf32>
    %147 = vector.shape_cast %146 : vector<1x1x32xf32> to vector<1x32xf32>
    %c0_55 = arith.constant 0 : index
    %c0_56 = arith.constant 0 : index
    %c0_57 = arith.constant 0 : index
    %148 = vector.load %arg13[%c0_55, %c0_56, %c0_57] : memref<1x1x32xf32, #tpu.memory_space<vmem>>, vector<1x1x32xf32>
    %149 = vector.shape_cast %148 : vector<1x1x32xf32> to vector<1x32xf32>
    %cst_58 = arith.constant dense<0.000000e+00> : vector<8xf32>
    %150 = vector.multi_reduction <add>, %145, %cst_58 [1] : vector<8x32xf32> to vector<8xf32>
    %151 = vector.shape_cast %150 : vector<8xf32> to vector<8x1xf32>
    %cst_59 = arith.constant 3.200000e+01 : f32
    %152 = vector.broadcast %cst_59 : f32 to vector<8x1xf32>
    %153 = arith.divf %151, %152 : vector<8x1xf32>
    %154 = vector.broadcast %153 : vector<8x1xf32> to vector<8x32xf32>
    %155 = arith.subf %145, %154 : vector<8x32xf32>
    %156 = arith.mulf %155, %155 : vector<8x32xf32>
    %cst_60 = arith.constant dense<0.000000e+00> : vector<8xf32>
    %157 = vector.multi_reduction <add>, %156, %cst_60 [1] : vector<8x32xf32> to vector<8xf32>
    %158 = vector.shape_cast %157 : vector<8xf32> to vector<8x1xf32>
    %cst_61 = arith.constant 3.200000e+01 : f32
    %159 = vector.broadcast %cst_61 : f32 to vector<8x1xf32>
    %160 = arith.divf %158, %159 : vector<8x1xf32>
    %161 = vector.broadcast %153 : vector<8x1xf32> to vector<8x32xf32>
    %162 = arith.subf %145, %161 : vector<8x32xf32>
    %cst_62 = arith.constant 9.99999974E-6 : f32
    %163 = vector.broadcast %cst_62 : f32 to vector<8x1xf32>
    %164 = arith.addf %160, %163 : vector<8x1xf32>
    %165 = math.rsqrt %164 : vector<8x1xf32>
    %166 = vector.broadcast %165 : vector<8x1xf32> to vector<8x32xf32>
    %167 = arith.mulf %162, %166 : vector<8x32xf32>
    %168 = vector.broadcast %147 : vector<1x32xf32> to vector<8x32xf32>
    %169 = arith.mulf %167, %168 : vector<8x32xf32>
    %170 = vector.broadcast %149 : vector<1x32xf32> to vector<8x32xf32>
    %171 = arith.addf %169, %170 : vector<8x32xf32>
    %172 = arith.truncf %171 : vector<8x32xf32> to vector<8x32xbf16>
    %cst_63 = arith.constant 0.000000e+00 : f32
    %173 = vector.broadcast %cst_63 : f32 to vector<8x32xf32>
    %c0_64 = arith.constant 0 : index
    %c0_65 = arith.constant 0 : index
    %c0_66 = arith.constant 0 : index
    %174 = vector.load %arg14[%c0_64, %c0_65, %c0_66] : memref<1x32x128xbf16, #tpu.memory_space<vmem>>, vector<1x32x128xbf16>
    %175 = vector.shape_cast %174 : vector<1x32x128xbf16> to vector<32x128xbf16>
    %cst_67 = arith.constant dense<0.000000e+00> : vector<8x128xf32>
    %176 = tpu.matmul %172, %175, %cst_67 {dimension_numbers = #tpu.dot_dimension_numbers<[1], [0], [0], [1], [0, 0, 1, 1], [], []>} : vector<8x32xbf16>, vector<32x128xbf16>, vector<8x128xf32> -> vector<8x128xf32>
    %c0_68 = arith.constant 0 : index
    %c0_69 = arith.constant 0 : index
    %c0_70 = arith.constant 0 : index
    %177 = vector.load %arg15[%c0_68, %c0_69, %c0_70] : memref<1x1x128xf32, #tpu.memory_space<vmem>>, vector<1x1x128xf32>
    %178 = vector.shape_cast %177 : vector<1x1x128xf32> to vector<1x128xf32>
    %179 = vector.broadcast %178 : vector<1x128xf32> to vector<8x128xf32>
    %180 = arith.addf %176, %179 : vector<8x128xf32>
    %cst_71 = arith.constant 5.000000e-01 : f32
    %181 = vector.broadcast %cst_71 : f32 to vector<8x128xf32>
    %182 = arith.mulf %181, %180 : vector<8x128xf32>
    %cst_72 = arith.constant 4.471500e-02 : f32
    %183 = vector.broadcast %cst_72 : f32 to vector<8x128xf32>
    %184 = arith.mulf %183, %180 : vector<8x128xf32>
    %185 = arith.mulf %184, %180 : vector<8x128xf32>
    %186 = arith.mulf %185, %180 : vector<8x128xf32>
    %187 = arith.addf %180, %186 : vector<8x128xf32>
    %cst_73 = arith.constant 0.797884583 : f32
    %188 = vector.broadcast %cst_73 : f32 to vector<8x128xf32>
    %189 = arith.mulf %188, %187 : vector<8x128xf32>
    %190 = math.tanh %189 : vector<8x128xf32>
    %cst_74 = arith.constant 1.000000e+00 : f32
    %191 = vector.broadcast %cst_74 : f32 to vector<8x128xf32>
    %192 = arith.addf %191, %190 : vector<8x128xf32>
    %193 = arith.mulf %182, %192 : vector<8x128xf32>
    %194 = arith.truncf %193 : vector<8x128xf32> to vector<8x128xbf16>
    %c0_75 = arith.constant 0 : index
    %c0_76 = arith.constant 0 : index
    %c0_77 = arith.constant 0 : index
    %195 = vector.load %arg16[%c0_75, %c0_76, %c0_77] : memref<1x128x32xbf16, #tpu.memory_space<vmem>>, vector<1x128x32xbf16>
    %196 = vector.shape_cast %195 : vector<1x128x32xbf16> to vector<128x32xbf16>
    %cst_78 = arith.constant dense<0.000000e+00> : vector<8x32xf32>
    %197 = tpu.matmul %194, %196, %cst_78 {dimension_numbers = #tpu.dot_dimension_numbers<[1], [0], [0], [1], [0, 0, 1, 1], [], []>} : vector<8x128xbf16>, vector<128x32xbf16>, vector<8x32xf32> -> vector<8x32xf32>
    %198 = arith.addf %173, %197 : vector<8x32xf32>
    %199 = arith.addf %145, %198 : vector<8x32xf32>
    %c0_79 = arith.constant 0 : index
    %c0_80 = arith.constant 0 : index
    %c0_81 = arith.constant 0 : index
    %200 = vector.load %arg17[%c0_79, %c0_80, %c0_81] : memref<1x1x32xf32, #tpu.memory_space<vmem>>, vector<1x1x32xf32>
    %201 = vector.shape_cast %200 : vector<1x1x32xf32> to vector<1x32xf32>
    %202 = vector.broadcast %201 : vector<1x32xf32> to vector<8x32xf32>
    %203 = arith.addf %199, %202 : vector<8x32xf32>
    %c0_82 = arith.constant 0 : index
    %c0_83 = arith.constant 0 : index
    %204 = vector.load %arg23[%c0_82, %c0_83] : memref<8x32xf32, #tpu.memory_space<vmem>>, vector<8x32xf32>
    tpu.vector_store %arg23[%c0_82, %c0_83], %203 {strides = array<i32>} : memref<8x32xf32, #tpu.memory_space<vmem>>, vector<8x32xf32>,
    %c1_i32 = arith.constant 1 : i32
    %205 = arith.cmpi eq, %arg1, %c1_i32 : i32
    %206 = arith.extui %205 : i1 to i32
    %c0_i32_84 = arith.constant 0 : i32
    %207 = arith.cmpi ne, %206, %c0_i32_84 : i32
    scf.if %207 {
      %c0_85 = arith.constant 0 : index
      %c0_86 = arith.constant 0 : index
      %208 = vector.load %arg18[%c0_85, %c0_86] : memref<1x32xf32, #tpu.memory_space<vmem>>, vector<1x32xf32>
      %c0_87 = arith.constant 0 : index
      %c0_88 = arith.constant 0 : index
      %209 = vector.load %arg19[%c0_87, %c0_88] : memref<1x32xf32, #tpu.memory_space<vmem>>, vector<1x32xf32>
      %cst_89 = arith.constant dense<0.000000e+00> : vector<8xf32>
      %210 = vector.multi_reduction <add>, %203, %cst_89 [1] : vector<8x32xf32> to vector<8xf32>
      %211 = vector.shape_cast %210 : vector<8xf32> to vector<8x1xf32>
      %cst_90 = arith.constant 3.200000e+01 : f32
      %212 = vector.broadcast %cst_90 : f32 to vector<8x1xf32>
      %213 = arith.divf %211, %212 : vector<8x1xf32>
      %214 = vector.broadcast %213 : vector<8x1xf32> to vector<8x32xf32>
      %215 = arith.subf %203, %214 : vector<8x32xf32>
      %216 = arith.mulf %215, %215 : vector<8x32xf32>
      %cst_91 = arith.constant dense<0.000000e+00> : vector<8xf32>
      %217 = vector.multi_reduction <add>, %216, %cst_91 [1] : vector<8x32xf32> to vector<8xf32>
      %218 = vector.shape_cast %217 : vector<8xf32> to vector<8x1xf32>
      %cst_92 = arith.constant 3.200000e+01 : f32
      %219 = vector.broadcast %cst_92 : f32 to vector<8x1xf32>
      %220 = arith.divf %218, %219 : vector<8x1xf32>
      %221 = vector.broadcast %213 : vector<8x1xf32> to vector<8x32xf32>
      %222 = arith.subf %203, %221 : vector<8x32xf32>
      %cst_93 = arith.constant 9.99999974E-6 : f32
      %223 = vector.broadcast %cst_93 : f32 to vector<8x1xf32>
      %224 = arith.addf %220, %223 : vector<8x1xf32>
      %225 = math.rsqrt %224 : vector<8x1xf32>
      %226 = vector.broadcast %225 : vector<8x1xf32> to vector<8x32xf32>
      %227 = arith.mulf %222, %226 : vector<8x32xf32>
      %228 = vector.broadcast %208 : vector<1x32xf32> to vector<8x32xf32>
      %229 = arith.mulf %227, %228 : vector<8x32xf32>
      %230 = vector.broadcast %209 : vector<1x32xf32> to vector<8x32xf32>
      %231 = arith.addf %229, %230 : vector<8x32xf32>
      %c0_94 = arith.constant 0 : index
      %c0_95 = arith.constant 0 : index
      %232 = vector.load %arg20[%c0_94, %c0_95] : memref<1x32xbf16, #tpu.memory_space<vmem>>, vector<1x32xbf16>
      %233 = arith.extf %232 : vector<1x32xbf16> to vector<1x32xf32>
      "tpu.trace_start"() <{level = 10 : i32, message = "oe,ne->on"}> : () -> ()
      %cst_96 = arith.constant dense<0.000000e+00> : vector<1x8xf32>
      %234 = tpu.matmul %233, %231, %cst_96 {dimension_numbers = #tpu.dot_dimension_numbers<[1], [1], [0], [0], [0, 0, 1, 0], [], []>} : vector<1x32xf32>, vector<8x32xf32>, vector<1x8xf32> -> vector<1x8xf32>
      "tpu.trace_stop"() : () -> ()
      %c0_97 = arith.constant 0 : index
      %c0_98 = arith.constant 0 : index
      %235 = vector.load %arg21[%c0_97, %c0_98] : memref<1x1xf32, #tpu.memory_space<vmem>>, vector<1x1xf32>
      %236 = vector.broadcast %235 : vector<1x1xf32> to vector<1x8xf32>
      %237 = arith.addf %234, %236 : vector<1x8xf32>
      %c0_99 = arith.constant 0 : index
      %c0_100 = arith.constant 0 : index
      %c0_101 = arith.constant 0 : index
      %238 = vector.load %arg22[%c0_99, %c0_100, %c0_101] : memref<1x1x8xf32, #tpu.memory_space<vmem>>, vector<1x1x8xf32>
      %239 = vector.shape_cast %238 : vector<1x1x8xf32> to vector<1x8xf32>
      %240 = vector.shape_cast %237 : vector<1x8xf32> to vector<1x1x8xf32>
      tpu.vector_store %arg22[%c0_99, %c0_100, %c0_101], %240 {strides = array<i32>} : memref<1x1x8xf32, #tpu.memory_space<vmem>>, vector<1x1x8xf32>,
    } else {
    }
    return
  }
  func.func @transform_0(%arg0: i32, %arg1: i32) -> (i32, i32, i32) {
    %c0_i32 = arith.constant 0 : i32
    %c0_i32_0 = arith.constant 0 : i32
    %c0_i32_1 = arith.constant 0 : i32
    return %arg0, %c0_i32, %c0_i32_0 : i32, i32, i32
  }
  func.func @transform_1(%arg0: i32, %arg1: i32) -> (i32, i32) {
    %c0_i32 = arith.constant 0 : i32
    %c0_i32_0 = arith.constant 0 : i32
    %c0_i32_1 = arith.constant 0 : i32
    return %c0_i32, %c0_i32_0 : i32, i32
  }
  func.func @transform_2(%arg0: i32, %arg1: i32) -> (i32, i32) {
    %c0_i32 = arith.constant 0 : i32
    %c0_i32_0 = arith.constant 0 : i32
    %c0_i32_1 = arith.constant 0 : i32
    return %c0_i32, %c0_i32_0 : i32, i32
  }
  func.func @transform_3(%arg0: i32, %arg1: i32) -> (i32, i32) {
    %c0_i32 = arith.constant 0 : i32
    %c0_i32_0 = arith.constant 0 : i32
    %c0_i32_1 = arith.constant 0 : i32
    return %c0_i32, %c0_i32_0 : i32, i32
  }
  func.func @transform_4(%arg0: i32, %arg1: i32) -> (i32, i32, i32) {
    %c0_i32 = arith.constant 0 : i32
    %c0_i32_0 = arith.constant 0 : i32
    %c0_i32_1 = arith.constant 0 : i32
    return %arg1, %c0_i32, %c0_i32_0 : i32, i32, i32
  }
  func.func @transform_5(%arg0: i32, %arg1: i32) -> (i32, i32, i32) {
    %c0_i32 = arith.constant 0 : i32
    %c0_i32_0 = arith.constant 0 : i32
    %c0_i32_1 = arith.constant 0 : i32
    return %arg1, %c0_i32, %c0_i32_0 : i32, i32, i32
  }
  func.func @transform_6(%arg0: i32, %arg1: i32) -> (i32, i32, i32) {
    %c0_i32 = arith.constant 0 : i32
    %c0_i32_0 = arith.constant 0 : i32
    %c0_i32_1 = arith.constant 0 : i32
    return %arg1, %c0_i32, %c0_i32_0 : i32, i32, i32
  }
  func.func @transform_7(%arg0: i32, %arg1: i32) -> (i32, i32, i32) {
    %c0_i32 = arith.constant 0 : i32
    %c0_i32_0 = arith.constant 0 : i32
    %c0_i32_1 = arith.constant 0 : i32
    return %arg1, %c0_i32, %c0_i32_0 : i32, i32, i32
  }
  func.func @transform_8(%arg0: i32, %arg1: i32) -> (i32, i32, i32) {
    %c0_i32 = arith.constant 0 : i32
    %c0_i32_0 = arith.constant 0 : i32
    %c0_i32_1 = arith.constant 0 : i32
    return %arg1, %c0_i32, %c0_i32_0 : i32, i32, i32
  }
  func.func @transform_9(%arg0: i32, %arg1: i32) -> (i32, i32, i32) {
    %c0_i32 = arith.constant 0 : i32
    %c0_i32_0 = arith.constant 0 : i32
    %c0_i32_1 = arith.constant 0 : i32
    return %arg1, %c0_i32, %c0_i32_0 : i32, i32, i32
  }
  func.func @transform_10(%arg0: i32, %arg1: i32) -> (i32, i32, i32) {
    %c0_i32 = arith.constant 0 : i32
    %c0_i32_0 = arith.constant 0 : i32
    %c0_i32_1 = arith.constant 0 : i32
    return %arg1, %c0_i32, %c0_i32_0 : i32, i32, i32
  }
  func.func @transform_11(%arg0: i32, %arg1: i32) -> (i32, i32, i32) {
    %c0_i32 = arith.constant 0 : i32
    %c0_i32_0 = arith.constant 0 : i32
    %c0_i32_1 = arith.constant 0 : i32
    return %arg1, %c0_i32, %c0_i32_0 : i32, i32, i32
  }
  func.func @transform_12(%arg0: i32, %arg1: i32) -> (i32, i32, i32) {
    %c0_i32 = arith.constant 0 : i32
    %c0_i32_0 = arith.constant 0 : i32
    %c0_i32_1 = arith.constant 0 : i32
    return %arg1, %c0_i32, %c0_i32_0 : i32, i32, i32
  }
  func.func @transform_13(%arg0: i32, %arg1: i32) -> (i32, i32, i32) {
    %c0_i32 = arith.constant 0 : i32
    %c0_i32_0 = arith.constant 0 : i32
    %c0_i32_1 = arith.constant 0 : i32
    return %arg1, %c0_i32, %c0_i32_0 : i32, i32, i32
  }
  func.func @transform_14(%arg0: i32, %arg1: i32) -> (i32, i32, i32) {
    %c0_i32 = arith.constant 0 : i32
    %c0_i32_0 = arith.constant 0 : i32
    %c0_i32_1 = arith.constant 0 : i32
    return %arg1, %c0_i32, %c0_i32_0 : i32, i32, i32
  }
  func.func @transform_15(%arg0: i32, %arg1: i32) -> (i32, i32, i32) {
    %c0_i32 = arith.constant 0 : i32
    %c0_i32_0 = arith.constant 0 : i32
    %c0_i32_1 = arith.constant 0 : i32
    return %arg1, %c0_i32, %c0_i32_0 : i32, i32, i32
  }
  func.func @transform_16(%arg0: i32, %arg1: i32) -> (i32, i32) {
    %c0_i32 = arith.constant 0 : i32
    %c0_i32_0 = arith.constant 0 : i32
    %c0_i32_1 = arith.constant 0 : i32
    return %c0_i32, %c0_i32_0 : i32, i32
  }
  func.func @transform_17(%arg0: i32, %arg1: i32) -> (i32, i32) {
    %c0_i32 = arith.constant 0 : i32
    %c0_i32_0 = arith.constant 0 : i32
    %c0_i32_1 = arith.constant 0 : i32
    return %c0_i32, %c0_i32_0 : i32, i32
  }
  func.func @transform_18(%arg0: i32, %arg1: i32) -> (i32, i32) {
    %c0_i32 = arith.constant 0 : i32
    %c0_i32_0 = arith.constant 0 : i32
    %c0_i32_1 = arith.constant 0 : i32
    return %c0_i32, %c0_i32_0 : i32, i32
  }
  func.func @transform_19(%arg0: i32, %arg1: i32) -> (i32, i32) {
    %c0_i32 = arith.constant 0 : i32
    %c0_i32_0 = arith.constant 0 : i32
    %c0_i32_1 = arith.constant 0 : i32
    return %c0_i32, %c0_i32_0 : i32, i32
  }
  func.func @transform_20(%arg0: i32, %arg1: i32) -> (i32, i32, i32) {
    %c0_i32 = arith.constant 0 : i32
    %c0_i32_0 = arith.constant 0 : i32
    %c0_i32_1 = arith.constant 0 : i32
    return %arg0, %c0_i32, %c0_i32_0 : i32, i32, i32
  }
}

</mosaic_0001>

<llo_original>
// kernel: tpu_custom_call.1
$region0: #{tpu_custom_call.1}
  #allocation0 [shape = 'u32[]', space=smem, size = 0x4, offset = 0x4, fixed_abs, tag = 'smem constant byte address 0x4 - core index']
  #allocation1 [shape = 'u32[144,128]{1,0:T(1,128)}', space=vmem, size = 0x12000, scoped, tag = 'internal scratch']
  #allocation2 [shape = 'f32[8,32]{1,0:T(8,128)}', space=vmem, size = 0x1000, scoped, tag = 'scratch operand']
  #allocation3 [shape = 'f32[8,32]{1,0:T(8,128)}', space=vmem, size = 0x1000, scoped, tag = 'scratch operand']
  #allocation4 [shape = 'f32[8,8]{1,0:T(8,128)}', space=vmem, size = 0x1000, scoped, tag = 'scratch operand']
  #allocation5 [shape = 'f32[1,1]{1,0:T(1,128)S(1)}', space=vmem, size = 0x200, scoped, tag = 'scoped memory for tpu_custom_call.1']
  %s0 = inlined_call_operand.vmem [shape: f32[2,8,4], index: 0, kind: input, shape index: {}]
  %s1 = inlined_call_operand.vmem [shape: f32[4,32], index: 1, kind: input, shape index: {}]
  %s2 = inlined_call_operand.vmem [shape: f32[1,32], index: 2, kind: input, shape index: {}]
  %s3 = inlined_call_operand.vmem [shape: bf16[8,32], index: 3, kind: input, shape index: {}]
  %s4 = inlined_call_operand.vmem [shape: f32[2,1,32], index: 4, kind: input, shape index: {}]
  %s5 = inlined_call_operand.vmem [shape: f32[2,1,32], index: 5, kind: input, shape index: {}]
  %s6 = inlined_call_operand.vmem [shape: bf16[2,32,96], index: 6, kind: input, shape index: {}]
  %s7 = inlined_call_operand.vmem [shape: f32[2,1,96], index: 7, kind: input, shape index: {}]
  %s8 = inlined_call_operand.vmem [shape: bf16[2,32,32], index: 8, kind: input, shape index: {}]
  %s9 = inlined_call_operand.vmem [shape: f32[2,1,32], index: 9, kind: input, shape index: {}]
  %s10 = inlined_call_operand.vmem [shape: f32[2,1,32], index: 10, kind: input, shape index: {}]
  %s11 = inlined_call_operand.vmem [shape: f32[2,1,32], index: 11, kind: input, shape index: {}]
  %s12 = inlined_call_operand.vmem [shape: bf16[2,32,128], index: 12, kind: input, shape index: {}]
  %s13 = inlined_call_operand.vmem [shape: f32[2,1,128], index: 13, kind: input, shape index: {}]
  %s14 = inlined_call_operand.vmem [shape: bf16[2,128,32], index: 14, kind: input, shape index: {}]
  %s15 = inlined_call_operand.vmem [shape: f32[2,1,32], index: 15, kind: input, shape index: {}]
  %s16 = inlined_call_operand.vmem [shape: f32[1,32], index: 16, kind: input, shape index: {}]
  %s17 = inlined_call_operand.vmem [shape: f32[1,32], index: 17, kind: input, shape index: {}]
  %s18 = inlined_call_operand.vmem [shape: bf16[1,32], index: 18, kind: input, shape index: {}]
  %s19 = inlined_call_operand.<no memory space> [shape: f32[1,1], index: 19, kind: input, shape index: {}]
  %s20 = inlined_call_operand.hbm [shape: f32[2,1,8], index: 20, kind: output, shape index: {}]
  %s21 = sld [smem:[#allocation0]]
  $region121: #{tpu_custom_call.1} parent=0
    _
  %s23 = ssub.s32 1, %s21
  %s24 = scalar_select 0, %s23, %s21
  %v25 = vstv %s19
  %26 = vst [vmem:[#allocation5] sm:$0x1] %v25
  $region1: #{tpu_custom_call.1} parent=0
    #allocation6 [shape = 'u8[1024]{0}', space=vmem, size = 0x400, scoped, tag = 'output window, operand 0']
    #allocation7 [shape = 's32[2]{0}', space=sflag, size = 0x8, scoped, tag = 'scoped memory for tpu_custom_call.1']
    %27 = vsyncpa [#allocation7], 0
    %s28 = scalar_lea.sflag [#allocation7], 1
    %29 = vsyncpa %s28, 0
    loop: start=0, step=1, limit=6
    $region2: #{tpu_custom_call.1} parent=1 // loop_pre_header
      _
    $region3: #{tpu_custom_call.1} parent=1 // loop_header
      %s31 = sphi 0, %s35
      %p32 = scmp.ge.s32.totalorder %s31, 6
      %s38 = sphi 0, %s50
      %s39 = sphi 0, %s46
      %s40 = sphi 0, %s38
      %s41 = sphi 0, %s39
      %s42 = sphi 0, %s40
      %s43 = sphi 0, %s41
      %s53 = sphi 0, %s55
      %s56 = sphi 0, %s53
      %s57 = sphi 0, %s56
      %s73 = sphi 0, %s57
      %s77 = sphi 0, %s77
      %s79 = sphi 0, %s77
      %s80 = sphi 0, %s79
      %s94 = sphi 0, %s80
      %s98 = sphi 0, %s98
      %s100 = sphi 0, %s98
      %s101 = sphi 0, %s100
      %s115 = sphi 0, %s101
      %s119 = sphi 0, %s119
      %s121 = sphi 0, %s119
      %s122 = sphi 0, %s121
      %s136 = sphi 0, %s122
      %s142 = sphi 0, %s144
      %s145 = sphi 0, %s142
      %s146 = sphi 0, %s145
      %s162 = sphi 0, %s146
      %s168 = sphi 0, %s170
      %s171 = sphi 0, %s168
      %s172 = sphi 0, %s171
      %s188 = sphi 0, %s172
      %s194 = sphi 0, %s196
      %s197 = sphi 0, %s194
      %s198 = sphi 0, %s197
      %s214 = sphi 0, %s198
      %s220 = sphi 0, %s222
      %s223 = sphi 0, %s220
      %s224 = sphi 0, %s223
      %s240 = sphi 0, %s224
      %s246 = sphi 0, %s248
      %s249 = sphi 0, %s246
      %s250 = sphi 0, %s249
      %s266 = sphi 0, %s250
      %s272 = sphi 0, %s274
      %s275 = sphi 0, %s272
      %s276 = sphi 0, %s275
      %s292 = sphi 0, %s276
      %s298 = sphi 0, %s300
      %s301 = sphi 0, %s298
      %s302 = sphi 0, %s301
      %s318 = sphi 0, %s302
      %s324 = sphi 0, %s326
      %s327 = sphi 0, %s324
      %s328 = sphi 0, %s327
      %s344 = sphi 0, %s328
      %s350 = sphi 0, %s352
      %s353 = sphi 0, %s350
      %s354 = sphi 0, %s353
      %s370 = sphi 0, %s354
      %s376 = sphi 0, %s378
      %s379 = sphi 0, %s376
      %s380 = sphi 0, %s379
      %s396 = sphi 0, %s380
      %s402 = sphi 0, %s404
      %s405 = sphi 0, %s402
      %s406 = sphi 0, %s405
      %s422 = sphi 0, %s406
      %s428 = sphi 0, %s430
      %s431 = sphi 0, %s428
      %s432 = sphi 0, %s431
      %s448 = sphi 0, %s432
      %s452 = sphi 0, %s452
      %s454 = sphi 0, %s452
      %s455 = sphi 0, %s454
      %s469 = sphi 0, %s455
      %s473 = sphi 0, %s473
      %s475 = sphi 0, %s473
      %s476 = sphi 0, %s475
      %s490 = sphi 0, %s476
      %s494 = sphi 0, %s494
      %s496 = sphi 0, %s494
      %s497 = sphi 0, %s496
      %s511 = sphi 0, %s497
      %s515 = sphi 0, %s515
      %s517 = sphi 0, %s515
      %s518 = sphi 0, %s517
      %s532 = sphi 0, %s518
      %s538 = sphi 0, %s540
      %s541 = sphi 0, %s538
      %s542 = sphi 0, %s541
      %s558 = sphi 0, %s542
    $region4: #{tpu_custom_call.1} parent=1 // loop_header_branch
      %34 = sbr.rel (%p32) target = $region8
    $region5: #{tpu_custom_call.1} parent=1 // loop_body
      %s36 = ssub.s32 %s31, 1
      %s37 = ssub.s32 %s31, 2
      %s44 = sadd.s32 1, %s39
      %p45 = scmp.ge.s32.totalorder %s44, 2
      %s46 = scalar_select %p45, 0, %s44
      %s47 = sadd.s32 1, %s38
      %s48 = scalar_select %p45, %s47, %s38
      %p49 = scmp.ge.s32.totalorder %s48, 2
      %s50 = scalar_select %p49, 0, %s48
      %s51 = ssub.s32 %s38, %s50
      %p52 = scmp.eq.s32.totalorder %s51, 0
      %s54 = sadd.s32 %s53, 1
      %s55 = scalar_select %p52, %s53, %s54
      %p58 = pneg %p52
      %p59 = scmp.eq.s32.totalorder %s31, 3
      %p60 = por %p58, %p59
      %p61 = scmp.ne.s32.totalorder %s53, %s56
      %p62 = scmp.eq.s32.totalorder %s31, 0
      %p63 = por %p61, %p62
      %p64 = scmp.ne.s32.totalorder %s53, %s56
      %p65 = scmp.eq.s32.totalorder %s36, 3
      %p66 = por %p64, %p65
      %p67 = scmp.ne.s32.totalorder %s56, %s57
      %p68 = scmp.eq.s32.totalorder %s36, 0
      %p69 = por %p67, %p68
      %p70 = scmp.ne.s32.totalorder %s56, %s57
      %p71 = scmp.eq.s32.totalorder %s37, 3
      %p72 = por %p70, %p71
      %p74 = scmp.ne.s32.totalorder %s57, %s73
      %p75 = scmp.eq.s32.totalorder %s37, 0
      %p76 = por %p74, %p75
      %s78 = sadd.s32 %s77, 1
      %p81 = scmp.eq.s32.totalorder %s31, 3
      %p82 = scmp.ne.s32.totalorder %s77, %s79
      %p83 = scmp.eq.s32.totalorder %s31, 0
      %p84 = por %p82, %p83
      %p85 = scmp.ne.s32.totalorder %s77, %s79
      %p86 = scmp.eq.s32.totalorder %s36, 3
      %p87 = por %p85, %p86
      %p88 = scmp.ne.s32.totalorder %s79, %s80
      %p89 = scmp.eq.s32.totalorder %s36, 0
      %p90 = por %p88, %p89
      %p91 = scmp.ne.s32.totalorder %s79, %s80
      %p92 = scmp.eq.s32.totalorder %s37, 3
      %p93 = por %p91, %p92
      %p95 = scmp.ne.s32.totalorder %s80, %s94
      %p96 = scmp.eq.s32.totalorder %s37, 0
      %p97 = por %p95, %p96
      %s99 = sadd.s32 %s98, 1
      %p102 = scmp.eq.s32.totalorder %s31, 3
      %p103 = scmp.ne.s32.totalorder %s98, %s100
      %p104 = scmp.eq.s32.totalorder %s31, 0
      %p105 = por %p103, %p104
      %p106 = scmp.ne.s32.totalorder %s98, %s100
      %p107 = scmp.eq.s32.totalorder %s36, 3
      %p108 = por %p106, %p107
      %p109 = scmp.ne.s32.totalorder %s100, %s101
      %p110 = scmp.eq.s32.totalorder %s36, 0
      %p111 = por %p109, %p110
      %p112 = scmp.ne.s32.totalorder %s100, %s101
      %p113 = scmp.eq.s32.totalorder %s37, 3
      %p114 = por %p112, %p113
      %p116 = scmp.ne.s32.totalorder %s101, %s115
      %p117 = scmp.eq.s32.totalorder %s37, 0
      %p118 = por %p116, %p117
      %s120 = sadd.s32 %s119, 1
      %p123 = scmp.eq.s32.totalorder %s31, 3
      %p124 = scmp.ne.s32.totalorder %s119, %s121
      %p125 = scmp.eq.s32.totalorder %s31, 0
      %p126 = por %p124, %p125
      %p127 = scmp.ne.s32.totalorder %s119, %s121
      %p128 = scmp.eq.s32.totalorder %s36, 3
      %p129 = por %p127, %p128
      %p130 = scmp.ne.s32.totalorder %s121, %s122
      %p131 = scmp.eq.s32.totalorder %s36, 0
      %p132 = por %p130, %p131
      %p133 = scmp.ne.s32.totalorder %s121, %s122
      %p134 = scmp.eq.s32.totalorder %s37, 3
      %p135 = por %p133, %p134
      %p137 = scmp.ne.s32.totalorder %s122, %s136
      %p138 = scmp.eq.s32.totalorder %s37, 0
      %p139 = por %p137, %p138
      %s140 = ssub.s32 %s39, %s46
      %p141 = scmp.eq.s32.totalorder %s140, 0
      %s143 = sadd.s32 %s142, 1
      %s144 = scalar_select %p141, %s142, %s143
      %p147 = pneg %p141
      %p148 = scmp.eq.s32.totalorder %s31, 3
      %p149 = por %p147, %p148
      %p150 = scmp.ne.s32.totalorder %s142, %s145
      %p151 = scmp.eq.s32.totalorder %s31, 0
      %p152 = por %p150, %p151
      %p153 = scmp.ne.s32.totalorder %s142, %s145
      %p154 = scmp.eq.s32.totalorder %s36, 3
      %p155 = por %p153, %p154
      %p156 = scmp.ne.s32.totalorder %s145, %s146
      %p157 = scmp.eq.s32.totalorder %s36, 0
      %p158 = por %p156, %p157
      %p159 = scmp.ne.s32.totalorder %s145, %s146
      %p160 = scmp.eq.s32.totalorder %s37, 3
      %p161 = por %p159, %p160
      %p163 = scmp.ne.s32.totalorder %s146, %s162
      %p164 = scmp.eq.s32.totalorder %s37, 0
      %p165 = por %p163, %p164
      %s166 = ssub.s32 %s39, %s46
      %p167 = scmp.eq.s32.totalorder %s166, 0
      %s169 = sadd.s32 %s168, 1
      %s170 = scalar_select %p167, %s168, %s169
      %p173 = pneg %p167
      %p174 = scmp.eq.s32.totalorder %s31, 3
      %p175 = por %p173, %p174
      %p176 = scmp.ne.s32.totalorder %s168, %s171
      %p177 = scmp.eq.s32.totalorder %s31, 0
      %p178 = por %p176, %p177
      %p179 = scmp.ne.s32.totalorder %s168, %s171
      %p180 = scmp.eq.s32.totalorder %s36, 3
      %p181 = por %p179, %p180
      %p182 = scmp.ne.s32.totalorder %s171, %s172
      %p183 = scmp.eq.s32.totalorder %s36, 0
      %p184 = por %p182, %p183
      %p185 = scmp.ne.s32.totalorder %s171, %s172
      %p186 = scmp.eq.s32.totalorder %s37, 3
      %p187 = por %p185, %p186
      %p189 = scmp.ne.s32.totalorder %s172, %s188
      %p190 = scmp.eq.s32.totalorder %s37, 0
      %p191 = por %p189, %p190
      %s192 = ssub.s32 %s39, %s46
      %p193 = scmp.eq.s32.totalorder %s192, 0
      %s195 = sadd.s32 %s194, 1
      %s196 = scalar_select %p193, %s194, %s195
      %p199 = pneg %p193
      %p200 = scmp.eq.s32.totalorder %s31, 3
      %p201 = por %p199, %p200
      %p202 = scmp.ne.s32.totalorder %s194, %s197
      %p203 = scmp.eq.s32.totalorder %s31, 0
      %p204 = por %p202, %p203
      %p205 = scmp.ne.s32.totalorder %s194, %s197
      %p206 = scmp.eq.s32.totalorder %s36, 3
      %p207 = por %p205, %p206
      %p208 = scmp.ne.s32.totalorder %s197, %s198
      %p209 = scmp.eq.s32.totalorder %s36, 0
      %p210 = por %p208, %p209
      %p211 = scmp.ne.s32.totalorder %s197, %s198
      %p212 = scmp.eq.s32.totalorder %s37, 3
      %p213 = por %p211, %p212
      %p215 = scmp.ne.s32.totalorder %s198, %s214
      %p216 = scmp.eq.s32.totalorder %s37, 0
      %p217 = por %p215, %p216
      %s218 = ssub.s32 %s39, %s46
      %p219 = scmp.eq.s32.totalorder %s218, 0
      %s221 = sadd.s32 %s220, 1
      %s222 = scalar_select %p219, %s220, %s221
      %p225 = pneg %p219
      %p226 = scmp.eq.s32.totalorder %s31, 3
      %p227 = por %p225, %p226
      %p228 = scmp.ne.s32.totalorder %s220, %s223
      %p229 = scmp.eq.s32.totalorder %s31, 0
      %p230 = por %p228, %p229
      %p231 = scmp.ne.s32.totalorder %s220, %s223
      %p232 = scmp.eq.s32.totalorder %s36, 3
      %p233 = por %p231, %p232
      %p234 = scmp.ne.s32.totalorder %s223, %s224
      %p235 = scmp.eq.s32.totalorder %s36, 0
      %p236 = por %p234, %p235
      %p237 = scmp.ne.s32.totalorder %s223, %s224
      %p238 = scmp.eq.s32.totalorder %s37, 3
      %p239 = por %p237, %p238
      %p241 = scmp.ne.s32.totalorder %s224, %s240
      %p242 = scmp.eq.s32.totalorder %s37, 0
      %p243 = por %p241, %p242
      %s244 = ssub.s32 %s39, %s46
      %p245 = scmp.eq.s32.totalorder %s244, 0
      %s247 = sadd.s32 %s246, 1
      %s248 = scalar_select %p245, %s246, %s247
      %p251 = pneg %p245
      %p252 = scmp.eq.s32.totalorder %s31, 3
      %p253 = por %p251, %p252
      %p254 = scmp.ne.s32.totalorder %s246, %s249
      %p255 = scmp.eq.s32.totalorder %s31, 0
      %p256 = por %p254, %p255
      %p257 = scmp.ne.s32.totalorder %s246, %s249
      %p258 = scmp.eq.s32.totalorder %s36, 3
      %p259 = por %p257, %p258
      %p260 = scmp.ne.s32.totalorder %s249, %s250
      %p261 = scmp.eq.s32.totalorder %s36, 0
      %p262 = por %p260, %p261
      %p263 = scmp.ne.s32.totalorder %s249, %s250
      %p264 = scmp.eq.s32.totalorder %s37, 3
      %p265 = por %p263, %p264
      %p267 = scmp.ne.s32.totalorder %s250, %s266
      %p268 = scmp.eq.s32.totalorder %s37, 0
      %p269 = por %p267, %p268
      %s270 = ssub.s32 %s39, %s46
      %p271 = scmp.eq.s32.totalorder %s270, 0
      %s273 = sadd.s32 %s272, 1
      %s274 = scalar_select %p271, %s272, %s273
      %p277 = pneg %p271
      %p278 = scmp.eq.s32.totalorder %s31, 3
      %p279 = por %p277, %p278
      %p280 = scmp.ne.s32.totalorder %s272, %s275
      %p281 = scmp.eq.s32.totalorder %s31, 0
      %p282 = por %p280, %p281
      %p283 = scmp.ne.s32.totalorder %s272, %s275
      %p284 = scmp.eq.s32.totalorder %s36, 3
      %p285 = por %p283, %p284
      %p286 = scmp.ne.s32.totalorder %s275, %s276
      %p287 = scmp.eq.s32.totalorder %s36, 0
      %p288 = por %p286, %p287
      %p289 = scmp.ne.s32.totalorder %s275, %s276
      %p290 = scmp.eq.s32.totalorder %s37, 3
      %p291 = por %p289, %p290
      %p293 = scmp.ne.s32.totalorder %s276, %s292
      %p294 = scmp.eq.s32.totalorder %s37, 0
      %p295 = por %p293, %p294
      %s296 = ssub.s32 %s39, %s46
      %p297 = scmp.eq.s32.totalorder %s296, 0
      %s299 = sadd.s32 %s298, 1
      %s300 = scalar_select %p297, %s298, %s299
      %p303 = pneg %p297
      %p304 = scmp.eq.s32.totalorder %s31, 3
      %p305 = por %p303, %p304
      %p306 = scmp.ne.s32.totalorder %s298, %s301
      %p307 = scmp.eq.s32.totalorder %s31, 0
      %p308 = por %p306, %p307
      %p309 = scmp.ne.s32.totalorder %s298, %s301
      %p310 = scmp.eq.s32.totalorder %s36, 3
      %p311 = por %p309, %p310
      %p312 = scmp.ne.s32.totalorder %s301, %s302
      %p313 = scmp.eq.s32.totalorder %s36, 0
      %p314 = por %p312, %p313
      %p315 = scmp.ne.s32.totalorder %s301, %s302
      %p316 = scmp.eq.s32.totalorder %s37, 3
      %p317 = por %p315, %p316
      %p319 = scmp.ne.s32.totalorder %s302, %s318
      %p320 = scmp.eq.s32.totalorder %s37, 0
      %p321 = por %p319, %p320
      %s322 = ssub.s32 %s39, %s46
      %p323 = scmp.eq.s32.totalorder %s322, 0
      %s325 = sadd.s32 %s324, 1
      %s326 = scalar_select %p323, %s324, %s325
      %p329 = pneg %p323
      %p330 = scmp.eq.s32.totalorder %s31, 3
      %p331 = por %p329, %p330
      %p332 = scmp.ne.s32.totalorder %s324, %s327
      %p333 = scmp.eq.s32.totalorder %s31, 0
      %p334 = por %p332, %p333
      %p335 = scmp.ne.s32.totalorder %s324, %s327
      %p336 = scmp.eq.s32.totalorder %s36, 3
      %p337 = por %p335, %p336
      %p338 = scmp.ne.s32.totalorder %s327, %s328
      %p339 = scmp.eq.s32.totalorder %s36, 0
      %p340 = por %p338, %p339
      %p341 = scmp.ne.s32.totalorder %s327, %s328
      %p342 = scmp.eq.s32.totalorder %s37, 3
      %p343 = por %p341, %p342
      %p345 = scmp.ne.s32.totalorder %s328, %s344
      %p346 = scmp.eq.s32.totalorder %s37, 0
      %p347 = por %p345, %p346
      %s348 = ssub.s32 %s39, %s46
      %p349 = scmp.eq.s32.totalorder %s348, 0
      %s351 = sadd.s32 %s350, 1
      %s352 = scalar_select %p349, %s350, %s351
      %p355 = pneg %p349
      %p356 = scmp.eq.s32.totalorder %s31, 3
      %p357 = por %p355, %p356
      %p358 = scmp.ne.s32.totalorder %s350, %s353
      %p359 = scmp.eq.s32.totalorder %s31, 0
      %p360 = por %p358, %p359
      %p361 = scmp.ne.s32.totalorder %s350, %s353
      %p362 = scmp.eq.s32.totalorder %s36, 3
      %p363 = por %p361, %p362
      %p364 = scmp.ne.s32.totalorder %s353, %s354
      %p365 = scmp.eq.s32.totalorder %s36, 0
      %p366 = por %p364, %p365
      %p367 = scmp.ne.s32.totalorder %s353, %s354
      %p368 = scmp.eq.s32.totalorder %s37, 3
      %p369 = por %p367, %p368
      %p371 = scmp.ne.s32.totalorder %s354, %s370
      %p372 = scmp.eq.s32.totalorder %s37, 0
      %p373 = por %p371, %p372
      %s374 = ssub.s32 %s39, %s46
      %p375 = scmp.eq.s32.totalorder %s374, 0
      %s377 = sadd.s32 %s376, 1
      %s378 = scalar_select %p375, %s376, %s377
      %p381 = pneg %p375
      %p382 = scmp.eq.s32.totalorder %s31, 3
      %p383 = por %p381, %p382
      %p384 = scmp.ne.s32.totalorder %s376, %s379
      %p385 = scmp.eq.s32.totalorder %s31, 0
      %p386 = por %p384, %p385
      %p387 = scmp.ne.s32.totalorder %s376, %s379
      %p388 = scmp.eq.s32.totalorder %s36, 3
      %p389 = por %p387, %p388
      %p390 = scmp.ne.s32.totalorder %s379, %s380
      %p391 = scmp.eq.s32.totalorder %s36, 0
      %p392 = por %p390, %p391
      %p393 = scmp.ne.s32.totalorder %s379, %s380
      %p394 = scmp.eq.s32.totalorder %s37, 3
      %p395 = por %p393, %p394
      %p397 = scmp.ne.s32.totalorder %s380, %s396
      %p398 = scmp.eq.s32.totalorder %s37, 0
      %p399 = por %p397, %p398
      %s400 = ssub.s32 %s39, %s46
      %p401 = scmp.eq.s32.totalorder %s400, 0
      %s403 = sadd.s32 %s402, 1
      %s404 = scalar_select %p401, %s402, %s403
      %p407 = pneg %p401
      %p408 = scmp.eq.s32.totalorder %s31, 3
      %p409 = por %p407, %p408
      %p410 = scmp.ne.s32.totalorder %s402, %s405
      %p411 = scmp.eq.s32.totalorder %s31, 0
      %p412 = por %p410, %p411
      %p413 = scmp.ne.s32.totalorder %s402, %s405
      %p414 = scmp.eq.s32.totalorder %s36, 3
      %p415 = por %p413, %p414
      %p416 = scmp.ne.s32.totalorder %s405, %s406
      %p417 = scmp.eq.s32.totalorder %s36, 0
      %p418 = por %p416, %p417
      %p419 = scmp.ne.s32.totalorder %s405, %s406
      %p420 = scmp.eq.s32.totalorder %s37, 3
      %p421 = por %p419, %p420
      %p423 = scmp.ne.s32.totalorder %s406, %s422
      %p424 = scmp.eq.s32.totalorder %s37, 0
      %p425 = por %p423, %p424
      %s426 = ssub.s32 %s39, %s46
      %p427 = scmp.eq.s32.totalorder %s426, 0
      %s429 = sadd.s32 %s428, 1
      %s430 = scalar_select %p427, %s428, %s429
      %p433 = pneg %p427
      %p434 = scmp.eq.s32.totalorder %s31, 3
      %p435 = por %p433, %p434
      %p436 = scmp.ne.s32.totalorder %s428, %s431
      %p437 = scmp.eq.s32.totalorder %s31, 0
      %p438 = por %p436, %p437
      %p439 = scmp.ne.s32.totalorder %s428, %s431
      %p440 = scmp.eq.s32.totalorder %s36, 3
      %p441 = por %p439, %p440
      %p442 = scmp.ne.s32.totalorder %s431, %s432
      %p443 = scmp.eq.s32.totalorder %s36, 0
      %p444 = por %p442, %p443
      %p445 = scmp.ne.s32.totalorder %s431, %s432
      %p446 = scmp.eq.s32.totalorder %s37, 3
      %p447 = por %p445, %p446
      %p449 = scmp.ne.s32.totalorder %s432, %s448
      %p450 = scmp.eq.s32.totalorder %s37, 0
      %p451 = por %p449, %p450
      %s453 = sadd.s32 %s452, 1
      %p456 = scmp.eq.s32.totalorder %s31, 3
      %p457 = scmp.ne.s32.totalorder %s452, %s454
      %p458 = scmp.eq.s32.totalorder %s31, 0
      %p459 = por %p457, %p458
      %p460 = scmp.ne.s32.totalorder %s452, %s454
      %p461 = scmp.eq.s32.totalorder %s36, 3
      %p462 = por %p460, %p461
      %p463 = scmp.ne.s32.totalorder %s454, %s455
      %p464 = scmp.eq.s32.totalorder %s36, 0
      %p465 = por %p463, %p464
      %p466 = scmp.ne.s32.totalorder %s454, %s455
      %p467 = scmp.eq.s32.totalorder %s37, 3
      %p468 = por %p466, %p467
      %p470 = scmp.ne.s32.totalorder %s455, %s469
      %p471 = scmp.eq.s32.totalorder %s37, 0
      %p472 = por %p470, %p471
      %s474 = sadd.s32 %s473, 1
      %p477 = scmp.eq.s32.totalorder %s31, 3
      %p478 = scmp.ne.s32.totalorder %s473, %s475
      %p479 = scmp.eq.s32.totalorder %s31, 0
      %p480 = por %p478, %p479
      %p481 = scmp.ne.s32.totalorder %s473, %s475
      %p482 = scmp.eq.s32.totalorder %s36, 3
      %p483 = por %p481, %p482
      %p484 = scmp.ne.s32.totalorder %s475, %s476
      %p485 = scmp.eq.s32.totalorder %s36, 0
      %p486 = por %p484, %p485
      %p487 = scmp.ne.s32.totalorder %s475, %s476
      %p488 = scmp.eq.s32.totalorder %s37, 3
      %p489 = por %p487, %p488
      %p491 = scmp.ne.s32.totalorder %s476, %s490
      %p492 = scmp.eq.s32.totalorder %s37, 0
      %p493 = por %p491, %p492
      %s495 = sadd.s32 %s494, 1
      %p498 = scmp.eq.s32.totalorder %s31, 3
      %p499 = scmp.ne.s32.totalorder %s494, %s496
      %p500 = scmp.eq.s32.totalorder %s31, 0
      %p501 = por %p499, %p500
      %p502 = scmp.ne.s32.totalorder %s494, %s496
      %p503 = scmp.eq.s32.totalorder %s36, 3
      %p504 = por %p502, %p503
      %p505 = scmp.ne.s32.totalorder %s496, %s497
      %p506 = scmp.eq.s32.totalorder %s36, 0
      %p507 = por %p505, %p506
      %p508 = scmp.ne.s32.totalorder %s496, %s497
      %p509 = scmp.eq.s32.totalorder %s37, 3
      %p510 = por %p508, %p509
      %p512 = scmp.ne.s32.totalorder %s497, %s511
      %p513 = scmp.eq.s32.totalorder %s37, 0
      %p514 = por %p512, %p513
      %s516 = sadd.s32 %s515, 1
      %p519 = scmp.eq.s32.totalorder %s31, 3
      %p520 = scmp.ne.s32.totalorder %s515, %s517
      %p521 = scmp.eq.s32.totalorder %s31, 0
      %p522 = por %p520, %p521
      %p523 = scmp.ne.s32.totalorder %s515, %s517
      %p524 = scmp.eq.s32.totalorder %s36, 3
      %p525 = por %p523, %p524
      %p526 = scmp.ne.s32.totalorder %s517, %s518
      %p527 = scmp.eq.s32.totalorder %s36, 0
      %p528 = por %p526, %p527
      %p529 = scmp.ne.s32.totalorder %s517, %s518
      %p530 = scmp.eq.s32.totalorder %s37, 3
      %p531 = por %p529, %p530
      %p533 = scmp.ne.s32.totalorder %s518, %s532
      %p534 = scmp.eq.s32.totalorder %s37, 0
      %p535 = por %p533, %p534
      %s536 = ssub.s32 %s38, %s50
      %p537 = scmp.eq.s32.totalorder %s536, 0
      %s539 = sadd.s32 %s538, 1
      %s540 = scalar_select %p537, %s538, %s539
      %p543 = pneg %p537
      %p544 = scmp.eq.s32.totalorder %s31, 3
      %p545 = por %p543, %p544
      %p546 = scmp.ne.s32.totalorder %s538, %s541
      %p547 = scmp.eq.s32.totalorder %s31, 0
      %p548 = por %p546, %p547
      %p549 = scmp.ne.s32.totalorder %s538, %s541
      %p550 = scmp.eq.s32.totalorder %s36, 3
      %p551 = por %p549, %p550
      %p552 = scmp.ne.s32.totalorder %s541, %s542
      %p553 = scmp.eq.s32.totalorder %s36, 0
      %p554 = por %p552, %p553
      %p555 = scmp.ne.s32.totalorder %s541, %s542
      %p556 = scmp.eq.s32.totalorder %s37, 3
      %p557 = por %p555, %p556
      %p559 = scmp.ne.s32.totalorder %s542, %s558
      %p560 = scmp.eq.s32.totalorder %s37, 0
      %p561 = por %p559, %p560
      %p562 = scmp.le.s32.totalorder 1, %s31
      %p563 = scmp.lt.s32.totalorder %s31, 5
      %p564 = pnand %p562, %p563
      %p565 = pneg %p564
      // Predicated region
      $region9: #{tpu_custom_call.1} parent=5 // pred_check
        _
      $region10: #{tpu_custom_call.1} parent=5 // pred_check_branch
        %567 = sbr.rel (%p564) target = $region12
      $region11: #{tpu_custom_call.1} parent=5 // pred_region
        %s568 = ssub.s32 %s31, 1
        // Predicated region
        $region13: #{tpu_custom_call.1} parent=11 // pred_check
          %p569 = pneg %p90
        $region14: #{tpu_custom_call.1} parent=11 // pred_check_branch
          %571 = sbr.rel (%p569) target = $region16
        $region15: #{tpu_custom_call.1} parent=11 // pred_region
          _
        $region16: #{tpu_custom_call.1} parent=11 // pred_fallthru
          _
        // Predicated region
        $region17: #{tpu_custom_call.1} parent=11 // pred_check
          %p572 = pneg %p111
        $region18: #{tpu_custom_call.1} parent=11 // pred_check_branch
          %574 = sbr.rel (%p572) target = $region20
        $region19: #{tpu_custom_call.1} parent=11 // pred_region
          _
        $region20: #{tpu_custom_call.1} parent=11 // pred_fallthru
          _
        // Predicated region
        $region21: #{tpu_custom_call.1} parent=11 // pred_check
          %p575 = pneg %p132
        $region22: #{tpu_custom_call.1} parent=11 // pred_check_branch
          %577 = sbr.rel (%p575) target = $region24
        $region23: #{tpu_custom_call.1} parent=11 // pred_region
          _
        $region24: #{tpu_custom_call.1} parent=11 // pred_fallthru
          _
        // Predicated region
        $region25: #{tpu_custom_call.1} parent=11 // pred_check
          %p578 = pneg %p465
        $region26: #{tpu_custom_call.1} parent=11 // pred_check_branch
          %580 = sbr.rel (%p578) target = $region28
        $region27: #{tpu_custom_call.1} parent=11 // pred_region
          _
        $region28: #{tpu_custom_call.1} parent=11 // pred_fallthru
          _
        // Predicated region
        $region29: #{tpu_custom_call.1} parent=11 // pred_check
          %p581 = pneg %p486
        $region30: #{tpu_custom_call.1} parent=11 // pred_check_branch
          %583 = sbr.rel (%p581) target = $region32
        $region31: #{tpu_custom_call.1} parent=11 // pred_region
          _
        $region32: #{tpu_custom_call.1} parent=11 // pred_fallthru
          _
        // Predicated region
        $region33: #{tpu_custom_call.1} parent=11 // pred_check
          %p584 = pneg %p507
        $region34: #{tpu_custom_call.1} parent=11 // pred_check_branch
          %586 = sbr.rel (%p584) target = $region36
        $region35: #{tpu_custom_call.1} parent=11 // pred_region
          _
        $region36: #{tpu_custom_call.1} parent=11 // pred_fallthru
          _
        // Predicated region
        $region37: #{tpu_custom_call.1} parent=11 // pred_check
          %p587 = pneg %p528
        $region38: #{tpu_custom_call.1} parent=11 // pred_check_branch
          %589 = sbr.rel (%p587) target = $region40
        $region39: #{tpu_custom_call.1} parent=11 // pred_region
          _
        $region40: #{tpu_custom_call.1} parent=11 // pred_fallthru
          _
      $region12: #{tpu_custom_call.1} parent=5 // pred_fallthru
        _
      %p590 = scmp.lt.s32.totalorder %s31, 4
      // Predicated region
      $region41: #{tpu_custom_call.1} parent=5 // pred_check
        %p591 = pneg %p590
      $region42: #{tpu_custom_call.1} parent=5 // pred_check_branch
        %593 = sbr.rel (%p591) target = $region44
      $region43: #{tpu_custom_call.1} parent=5 // pred_region
        // Predicated region
        $region45: #{tpu_custom_call.1} parent=43 // pred_check
          %p594 = pneg %p63
        $region46: #{tpu_custom_call.1} parent=43 // pred_check_branch
          %596 = sbr.rel (%p594) target = $region48
        $region47: #{tpu_custom_call.1} parent=43 // pred_region
          %p597 = scmp.lt.s32.totalorder %s38, 1
          %s598 = scalar_select %p597, %s38, 1
          %s599 = smul.addr %s598, 8
          %s600 = scalar_lea.vmem %s0, %s599
        $region48: #{tpu_custom_call.1} parent=43 // pred_fallthru
          _
        // Predicated region
        $region49: #{tpu_custom_call.1} parent=43 // pred_check
          %p601 = pneg %p152
        $region50: #{tpu_custom_call.1} parent=43 // pred_check_branch
          %603 = sbr.rel (%p601) target = $region52
        $region51: #{tpu_custom_call.1} parent=43 // pred_region
          %p604 = scmp.lt.s32.totalorder %s39, 1
          %s605 = scalar_select %p604, %s39, 1
          %s606 = scalar_lea.vmem %s4, %s605
        $region52: #{tpu_custom_call.1} parent=43 // pred_fallthru
          _
        // Predicated region
        $region53: #{tpu_custom_call.1} parent=43 // pred_check
          %p607 = pneg %p178
        $region54: #{tpu_custom_call.1} parent=43 // pred_check_branch
          %609 = sbr.rel (%p607) target = $region56
        $region55: #{tpu_custom_call.1} parent=43 // pred_region
          %p610 = scmp.lt.s32.totalorder %s39, 1
          %s611 = scalar_select %p610, %s39, 1
          %s612 = scalar_lea.vmem %s5, %s611
        $region56: #{tpu_custom_call.1} parent=43 // pred_fallthru
          _
        // Predicated region
        $region57: #{tpu_custom_call.1} parent=43 // pred_check
          %p613 = pneg %p204
        $region58: #{tpu_custom_call.1} parent=43 // pred_check_branch
          %615 = sbr.rel (%p613) target = $region60
        $region59: #{tpu_custom_call.1} parent=43 // pred_region
          %p616 = scmp.lt.s32.totalorder %s39, 1
          %s617 = scalar_select %p616, %s39, 1
          %s618 = smul.addr %s617, 4
          %s619 = smul.addr %s618, 4
          %s620 = scalar_lea.vmem %s6, %s619
        $region60: #{tpu_custom_call.1} parent=43 // pred_fallthru
          _
        // Predicated region
        $region61: #{tpu_custom_call.1} parent=43 // pred_check
          %p621 = pneg %p230
        $region62: #{tpu_custom_call.1} parent=43 // pred_check_branch
          %623 = sbr.rel (%p621) target = $region64
        $region63: #{tpu_custom_call.1} parent=43 // pred_region
          %p624 = scmp.lt.s32.totalorder %s39, 1
          %s625 = scalar_select %p624, %s39, 1
          %s626 = scalar_lea.vmem %s7, %s625
        $region64: #{tpu_custom_call.1} parent=43 // pred_fallthru
          _
        // Predicated region
        $region65: #{tpu_custom_call.1} parent=43 // pred_check
          %p627 = pneg %p256
        $region66: #{tpu_custom_call.1} parent=43 // pred_check_branch
          %629 = sbr.rel (%p627) target = $region68
        $region67: #{tpu_custom_call.1} parent=43 // pred_region
          %p630 = scmp.lt.s32.totalorder %s39, 1
          %s631 = scalar_select %p630, %s39, 1
          %s632 = smul.addr %s631, 4
          %s633 = smul.addr %s632, 4
          %s634 = scalar_lea.vmem %s8, %s633
        $region68: #{tpu_custom_call.1} parent=43 // pred_fallthru
          _
        // Predicated region
        $region69: #{tpu_custom_call.1} parent=43 // pred_check
          %p635 = pneg %p282
        $region70: #{tpu_custom_call.1} parent=43 // pred_check_branch
          %637 = sbr.rel (%p635) target = $region72
        $region71: #{tpu_custom_call.1} parent=43 // pred_region
          %p638 = scmp.lt.s32.totalorder %s39, 1
          %s639 = scalar_select %p638, %s39, 1
          %s640 = scalar_lea.vmem %s9, %s639
        $region72: #{tpu_custom_call.1} parent=43 // pred_fallthru
          _
        // Predicated region
        $region73: #{tpu_custom_call.1} parent=43 // pred_check
          %p641 = pneg %p308
        $region74: #{tpu_custom_call.1} parent=43 // pred_check_branch
          %643 = sbr.rel (%p641) target = $region76
        $region75: #{tpu_custom_call.1} parent=43 // pred_region
          %p644 = scmp.lt.s32.totalorder %s39, 1
          %s645 = scalar_select %p644, %s39, 1
          %s646 = scalar_lea.vmem %s10, %s645
        $region76: #{tpu_custom_call.1} parent=43 // pred_fallthru
          _
        // Predicated region
        $region77: #{tpu_custom_call.1} parent=43 // pred_check
          %p647 = pneg %p334
        $region78: #{tpu_custom_call.1} parent=43 // pred_check_branch
          %649 = sbr.rel (%p647) target = $region80
        $region79: #{tpu_custom_call.1} parent=43 // pred_region
          %p650 = scmp.lt.s32.totalorder %s39, 1
          %s651 = scalar_select %p650, %s39, 1
          %s652 = scalar_lea.vmem %s11, %s651
        $region80: #{tpu_custom_call.1} parent=43 // pred_fallthru
          _
        // Predicated region
        $region81: #{tpu_custom_call.1} parent=43 // pred_check
          %p653 = pneg %p360
        $region82: #{tpu_custom_call.1} parent=43 // pred_check_branch
          %655 = sbr.rel (%p653) target = $region84
        $region83: #{tpu_custom_call.1} parent=43 // pred_region
          %p656 = scmp.lt.s32.totalorder %s39, 1
          %s657 = scalar_select %p656, %s39, 1
          %s658 = smul.addr %s657, 4
          %s659 = smul.addr %s658, 4
          %s660 = scalar_lea.vmem %s12, %s659
        $region84: #{tpu_custom_call.1} parent=43 // pred_fallthru
          _
        // Predicated region
        $region85: #{tpu_custom_call.1} parent=43 // pred_check
          %p661 = pneg %p386
        $region86: #{tpu_custom_call.1} parent=43 // pred_check_branch
          %663 = sbr.rel (%p661) target = $region88
        $region87: #{tpu_custom_call.1} parent=43 // pred_region
          %p664 = scmp.lt.s32.totalorder %s39, 1
          %s665 = scalar_select %p664, %s39, 1
          %s666 = scalar_lea.vmem %s13, %s665
        $region88: #{tpu_custom_call.1} parent=43 // pred_fallthru
          _
        // Predicated region
        $region89: #{tpu_custom_call.1} parent=43 // pred_check
          %p667 = pneg %p412
        $region90: #{tpu_custom_call.1} parent=43 // pred_check_branch
          %669 = sbr.rel (%p667) target = $region92
        $region91: #{tpu_custom_call.1} parent=43 // pred_region
          %p670 = scmp.lt.s32.totalorder %s39, 1
          %s671 = scalar_select %p670, %s39, 1
          %s672 = smul.addr %s671, 16
          %s673 = smul.addr %s672, 4
          %s674 = scalar_lea.vmem %s14, %s673
        $region92: #{tpu_custom_call.1} parent=43 // pred_fallthru
          _
        // Predicated region
        $region93: #{tpu_custom_call.1} parent=43 // pred_check
          %p675 = pneg %p438
        $region94: #{tpu_custom_call.1} parent=43 // pred_check_branch
          %677 = sbr.rel (%p675) target = $region96
        $region95: #{tpu_custom_call.1} parent=43 // pred_region
          %p678 = scmp.lt.s32.totalorder %s39, 1
          %s679 = scalar_select %p678, %s39, 1
          %s680 = scalar_lea.vmem %s15, %s679
        $region96: #{tpu_custom_call.1} parent=43 // pred_fallthru
          _
      $region44: #{tpu_custom_call.1} parent=5 // pred_fallthru
        _
      %p681 = scmp.le.s32.totalorder 1, %s31
      %p682 = scmp.lt.s32.totalorder %s31, 5
      %p683 = pnand %p681, %p682
      %p684 = pneg %p683
      // Predicated region
      $region97: #{tpu_custom_call.1} parent=5 // pred_check
        _
      $region98: #{tpu_custom_call.1} parent=5 // pred_check_branch
        %686 = sbr.rel (%p683) target = $region100
      $region99: #{tpu_custom_call.1} parent=5 // pred_region
        %s687 = ssub.s32 %s31, 1
        %p688 = scmp.lt.s32.totalorder %s40, 1
        %s689 = scalar_select %p688, %s40, 1
        %s690 = smul.addr %s689, 8
        %s691 = scalar_lea.vmem %s0, %s690
        %p692 = pneg %p69
        %p693 = pneg %p66
        %p694 = pneg %p90
        %p695 = pneg %p87
        %p696 = pneg %p111
        %p697 = pneg %p108
        %p698 = pneg %p132
        %p699 = pneg %p129
        %p700 = scmp.lt.s32.totalorder %s41, 1
        %s701 = scalar_select %p700, %s41, 1
        %s702 = scalar_lea.vmem %s4, %s701
        %p703 = pneg %p158
        %p704 = pneg %p155
        %p705 = scmp.lt.s32.totalorder %s41, 1
        %s706 = scalar_select %p705, %s41, 1
        %s707 = scalar_lea.vmem %s5, %s706
        %p708 = pneg %p184
        %p709 = pneg %p181
        %p710 = scmp.lt.s32.totalorder %s41, 1
        %s711 = scalar_select %p710, %s41, 1
        %s712 = smul.addr %s711, 4
        %s713 = smul.addr %s712, 4
        %s714 = scalar_lea.vmem %s6, %s713
        %p715 = pneg %p210
        %p716 = pneg %p207
        %p717 = scmp.lt.s32.totalorder %s41, 1
        %s718 = scalar_select %p717, %s41, 1
        %s719 = scalar_lea.vmem %s7, %s718
        %p720 = pneg %p236
        %p721 = pneg %p233
        %p722 = scmp.lt.s32.totalorder %s41, 1
        %s723 = scalar_select %p722, %s41, 1
        %s724 = smul.addr %s723, 4
        %s725 = smul.addr %s724, 4
        %s726 = scalar_lea.vmem %s8, %s725
        %p727 = pneg %p262
        %p728 = pneg %p259
        %p729 = scmp.lt.s32.totalorder %s41, 1
        %s730 = scalar_select %p729, %s41, 1
        %s731 = scalar_lea.vmem %s9, %s730
        %p732 = pneg %p288
        %p733 = pneg %p285
        %p734 = scmp.lt.s32.totalorder %s41, 1
        %s735 = scalar_select %p734, %s41, 1
        %s736 = scalar_lea.vmem %s10, %s735
        %p737 = pneg %p314
        %p738 = pneg %p311
        %p739 = scmp.lt.s32.totalorder %s41, 1
        %s740 = scalar_select %p739, %s41, 1
        %s741 = scalar_lea.vmem %s11, %s740
        %p742 = pneg %p340
        %p743 = pneg %p337
        %p744 = scmp.lt.s32.totalorder %s41, 1
        %s745 = scalar_select %p744, %s41, 1
        %s746 = smul.addr %s745, 4
        %s747 = smul.addr %s746, 4
        %s748 = scalar_lea.vmem %s12, %s747
        %p749 = pneg %p366
        %p750 = pneg %p363
        %p751 = scmp.lt.s32.totalorder %s41, 1
        %s752 = scalar_select %p751, %s41, 1
        %s753 = scalar_lea.vmem %s13, %s752
        %p754 = pneg %p392
        %p755 = pneg %p389
        %p756 = scmp.lt.s32.totalorder %s41, 1
        %s757 = scalar_select %p756, %s41, 1
        %s758 = smul.addr %s757, 16
        %s759 = smul.addr %s758, 4
        %s760 = scalar_lea.vmem %s14, %s759
        %p761 = pneg %p418
        %p762 = pneg %p415
        %p763 = scmp.lt.s32.totalorder %s41, 1
        %s764 = scalar_select %p763, %s41, 1
        %s765 = scalar_lea.vmem %s15, %s764
        %p766 = pneg %p444
        %p767 = pneg %p441
        %p768 = pneg %p465
        %p769 = pneg %p462
        %p770 = pneg %p486
        %p771 = pneg %p483
        %p772 = pneg %p507
        %p773 = pneg %p504
        %p774 = pneg %p528
        %p775 = pneg %p525
        %p776 = pneg %p554
        %p777 = pneg %p551
        %s778 = sand.u32 %s541, 1
        %s779 = scalar_lea.sflag [#allocation7], %s778
        %s780 = sand.u32 %s541, 1
        %s781 = scalar_lea.vmem [#allocation6], %s780
        %p782 = scmp.lt.s32.totalorder %s40, 1
        %s783 = scalar_select %p782, %s40, 1
        %s784 = smul.addr %s783, 8
        %s785 = scalar_lea.vmem %s0, %s784
        %p786 = scmp.lt.s32.totalorder %s41, 1
        %s787 = scalar_select %p786, %s41, 1
        %s788 = scalar_lea.vmem %s4, %s787
        %p789 = scmp.lt.s32.totalorder %s41, 1
        %s790 = scalar_select %p789, %s41, 1
        %s791 = scalar_lea.vmem %s5, %s790
        %p792 = scmp.lt.s32.totalorder %s41, 1
        %s793 = scalar_select %p792, %s41, 1
        %s794 = smul.addr %s793, 4
        %s795 = smul.addr %s794, 4
        %s796 = scalar_lea.vmem %s6, %s795
        %p797 = scmp.lt.s32.totalorder %s41, 1
        %s798 = scalar_select %p797, %s41, 1
        %s799 = scalar_lea.vmem %s7, %s798
        %p800 = scmp.lt.s32.totalorder %s41, 1
        %s801 = scalar_select %p800, %s41, 1
        %s802 = smul.addr %s801, 4
        %s803 = smul.addr %s802, 4
        %s804 = scalar_lea.vmem %s8, %s803
        %p805 = scmp.lt.s32.totalorder %s41, 1
        %s806 = scalar_select %p805, %s41, 1
        %s807 = scalar_lea.vmem %s9, %s806
        %p808 = scmp.lt.s32.totalorder %s41, 1
        %s809 = scalar_select %p808, %s41, 1
        %s810 = scalar_lea.vmem %s10, %s809
        %p811 = scmp.lt.s32.totalorder %s41, 1
        %s812 = scalar_select %p811, %s41, 1
        %s813 = scalar_lea.vmem %s11, %s812
        %p814 = scmp.lt.s32.totalorder %s41, 1
        %s815 = scalar_select %p814, %s41, 1
        %s816 = smul.addr %s815, 4
        %s817 = smul.addr %s816, 4
        %s818 = scalar_lea.vmem %s12, %s817
        %p819 = scmp.lt.s32.totalorder %s41, 1
        %s820 = scalar_select %p819, %s41, 1
        %s821 = scalar_lea.vmem %s13, %s820
        %p822 = scmp.lt.s32.totalorder %s41, 1
        %s823 = scalar_select %p822, %s41, 1
        %s824 = smul.addr %s823, 16
        %s825 = smul.addr %s824, 4
        %s826 = scalar_lea.vmem %s14, %s825
        %p827 = scmp.lt.s32.totalorder %s41, 1
        %s828 = scalar_select %p827, %s41, 1
        %s829 = scalar_lea.vmem %s15, %s828
        %p831 = scmp.eq.s32.totalorder %s41, 0
        // Predicated region
        $region101: #{tpu_custom_call.1} parent=99 // pred_check
          %p832 = pneg %p831
        $region102: #{tpu_custom_call.1} parent=99 // pred_check_branch
          %834 = sbr.rel (%p832) target = $region104
        $region103: #{tpu_custom_call.1} parent=99 // pred_region
          %v835 = vld [vmem:[%s785] sm:$0xff]
          %v836 = vld [vmem:[%s1] sm:$0xf]
          %v837 = vld [vmem:[%s2] sm:$0x1]
          %v839 = vlaneseq
          %v840 = vshrl.u32 %v839, 7
          %v841 = vsub.s32 0, %v840
          %v842 = vrot.slane %v837, %v841
          %vm844 = vcmask 31744
          %v846 = vsel %vm844, %v835, 0
          %vm848 = vcmask 1043456
          %v850 = vsel %vm848, %v836, 0
          %852 = vmatprep.subr.mxu0 0.0
          %853 = vmatpush1.msra.mxu0 %v850
          %854 = vmatprep.subr.mxu0 0.0
          %855 = vmatpush1.msra.mxu0 0.0
          %856 = vmatprep.subr.mxu0 0.0
          %857 = vmatpush1.msra.mxu0 0.0
          %858 = vmatprep.subr.mxu0 0.0
          %859 = vmatpush1.msra.mxu0 0.0
          %860 = vmatprep.subr.mxu0 0.0
          %861 = vmatpush1.msra.mxu0 0.0
          %862 = vmatprep.subr.mxu0 0.0
          %863 = vmatpush1.msra.mxu0 0.0
          %864 = vmatprep.subr.mxu0 0.0
          %865 = vmatpush1.msra.mxu0 0.0
          %866 = vmatprep.subr.mxu0 0.0
          %867 = vmatpush1.msra.mxu0 0.0
          %868 = vmatprep.subr.mxu0 0.0
          %869 = vmatpush1.msra.mxu0 0.0
          %870 = vmatprep.subr.mxu0 0.0
          %871 = vmatpush1.msra.mxu0 0.0
          %872 = vmatprep.subr.mxu0 0.0
          %873 = vmatpush1.msra.mxu0 0.0
          %874 = vmatprep.subr.mxu0 0.0
          %875 = vmatpush1.msra.mxu0 0.0
          %876 = vmatprep.subr.mxu0 0.0
          %877 = vmatpush1.msra.mxu0 0.0
          %878 = vmatprep.subr.mxu0 0.0
          %879 = vmatpush1.msra.mxu0 0.0
          %880 = vmatprep.subr.mxu0 0.0
          %881 = vmatpush1.msra.mxu0 0.0
          %882 = vmatprep.subr.mxu0 0.0
          %883 = vmatpush1.msra.mxu0 0.0
          %884 = vmatprep.subr.mxu0 0.0
          %885 = vmatpush1.msra.mxu0 0.0
          %886 = vmatprep.subr.mxu0 0.0
          %887 = vmatpush1.msra.mxu0 0.0
          %888 = vmatprep.subr.mxu0 0.0
          %889 = vmatpush1.msra.mxu0 0.0
          %890 = vmatprep.subr.mxu0 0.0
          %891 = vmatpush1.msra.mxu0 0.0
          %892 = vmatprep.subr.mxu0 0.0
          %893 = vmatpush1.msra.mxu0 0.0
          %894 = vmatprep.subr.mxu0 0.0
          %895 = vmatpush1.msra.mxu0 0.0
          %896 = vmatprep.subr.mxu0 0.0
          %897 = vmatpush1.msra.mxu0 0.0
          %898 = vmatprep.subr.mxu0 0.0
          %899 = vmatpush1.msra.mxu0 0.0
          %900 = vmatprep.subr.mxu0 0.0
          %901 = vmatpush1.msra.mxu0 0.0
          %902 = vmatprep.subr.mxu0 0.0
          %903 = vmatpush1.msra.mxu0 0.0
          %904 = vmatprep.subr.mxu0 0.0
          %905 = vmatpush1.msra.mxu0 0.0
          %906 = vmatprep.subr.mxu0 0.0
          %907 = vmatpush1.msra.mxu0 0.0
          %908 = vmatprep.subr.mxu0 0.0
          %909 = vmatpush1.msra.mxu0 0.0
          %910 = vmatprep.subr.mxu0 0.0
          %911 = vmatpush1.msra.mxu0 0.0
          %912 = vmatprep.subr.mxu0 0.0
          %913 = vmatpush1.msra.mxu0 0.0
          %914 = vmatprep.subr.mxu0 0.0
          %915 = vmatpush1.msra.mxu0 0.0
          %916 = vmatprep.mubr.f32.mxu0 0.0
          %917 = vmatmul.mubr.f32.gmra.mrb[0].mxu0 %v846
          %v918 = vpop.f32.mrb[0].mxu0
          %v919 = vadd.f32 %v842, %v918
          %v920 = vpop.f32.mrb[0].mxu0
          %921 = vdwg.mxu0
          %v922 = vld [vmem:[%s3] sm:$0xf]
          %v923 = vunpack.c.l.bf16 %v922
          %v924 = vadd.f32 %v919, %v923
          %vm925 = vcmask 261120
          %926 = vst.msk [vmem:[#allocation2] sm:$0xff] %vm925, %v924
          %v927 = vlaneseq
          %v928 = vshrl.u32 %v927, 7
          %v929 = vlaneseq
          %v930 = vand.u32 %v929, 127
          %vm931 = vcmp.le.s32.totalorder %v930, %v928
          %v932 = vsel %vm931, 0.0, -1e+30
          %vm933 = vcmask 64512
          %934 = vst.msk [vmem:[#allocation4] sm:$0xff] %vm933, %v932
        $region104: #{tpu_custom_call.1} parent=99 // pred_fallthru
          _
        %v935 = vld [vmem:[#allocation2] sm:$0xff]
        %v936 = vld [vmem:[%s788] sm:$0x1]
        %v937 = vld [vmem:[%s791] sm:$0x1]
        %vm938 = vcmask 261120
        %v939 = vsel %vm938, %v935, 0.0
        %940 = vadd.xlane.f32.xlu0 %v939
        %v941 = vpop.xlane.xlu0 %940
        %v942 = vrcp.pop 32.0
        %v943 = vmul.f32 %v941, %v942
        %v944 = vsub.f32 %v935, %v943
        %v945 = vmul.f32 %v944, %v944
        %v946 = vsel %vm938, %v945, 0.0
        %947 = vadd.xlane.f32.xlu0 %v946
        %v948 = vpop.xlane.xlu0 %947
        %v949 = vmul.f32 %v948, %v942
        %v950 = vadd.f32 %v949, 1e-05
        %v951 = vrsqrt.pop %v950
        %v952 = vmul.f32 %v944, %v951
        %v954 = vlaneseq
        %v955 = vshrl.u32 %v954, 7
        %v956 = vsub.s32 0, %v955
        %v957 = vrot.slane %v936, %v956
        %v959 = vmul.f32 %v952, %v957
        %v961 = vlaneseq
        %v962 = vshrl.u32 %v961, 7
        %v963 = vsub.s32 0, %v962
        %v964 = vrot.slane %v937, %v963
        %v966 = vadd.f32 %v959, %v964
        %v967 = vpack.c.bf16 %v966, %v966
        %v968 = vld [vmem:[%s796] sm:$0xf]
        %v969 = vld [vmem:[%s796 + $0x4] sm:$0xf]
        %v970 = vld [vmem:[%s796 + $0x8] sm:$0xf]
        %v971 = vld [vmem:[%s796 + $0xc] sm:$0xf]
        %v972 = vld [vmem:[%s799] sm:$0x1]
        %v974 = vlaneseq
        %v975 = vshrl.u32 %v974, 7
        %v976 = vsub.s32 0, %v975
        %v977 = vrot.slane %v972, %v976
        %v983 = vunpack.c.l.b16 %v968
        %v984 = vunpack.c.l.b16 %v969
        %v985 = vunpack.c.l.b16 %v970
        %v986 = vunpack.c.l.b16 %v971
        %v987 = vpack.c.b16 %v984, %v983
        %v988 = vpack.c.b16 %v986, %v985
        %v992 = vsel %vm938, %v967, 0
        %994 = vmatprep.subr.bf16.mxu0 0
        %995 = vmatpush1.bf16.msra.mxu0 %v987
        %996 = vmatprep.subr.bf16.mxu0 0
        %997 = vmatpush1.bf16.msra.mxu0 %v988
        %998 = vmatprep.subr.bf16.mxu0 0
        %999 = vmatpush1.bf16.msra.mxu0 0
        %1000 = vmatprep.subr.bf16.mxu0 0
        %1001 = vmatpush1.bf16.msra.mxu0 0
        %1002 = vmatprep.subr.bf16.mxu0 0
        %1003 = vmatpush1.bf16.msra.mxu0 0
        %1004 = vmatprep.subr.bf16.mxu0 0
        %1005 = vmatpush1.bf16.msra.mxu0 0
        %1006 = vmatprep.subr.bf16.mxu0 0
        %1007 = vmatpush1.bf16.msra.mxu0 0
        %1008 = vmatprep.subr.bf16.mxu0 0
        %1009 = vmatpush1.bf16.msra.mxu0 0
        %1010 = vmatprep.subr.bf16.mxu0 0
        %1011 = vmatpush1.bf16.msra.mxu0 0
        %1012 = vmatprep.subr.bf16.mxu0 0
        %1013 = vmatpush1.bf16.msra.mxu0 0
        %1014 = vmatprep.subr.bf16.mxu0 0
        %1015 = vmatpush1.bf16.msra.mxu0 0
        %1016 = vmatprep.subr.bf16.mxu0 0
        %1017 = vmatpush1.bf16.msra.mxu0 0
        %1018 = vmatprep.subr.bf16.mxu0 0
        %1019 = vmatpush1.bf16.msra.mxu0 0
        %1020 = vmatprep.subr.bf16.mxu0 0
        %1021 = vmatpush1.bf16.msra.mxu0 0
        %1022 = vmatprep.subr.bf16.mxu0 0
        %1023 = vmatpush1.bf16.msra.mxu0 0
        %1024 = vmatprep.subr.bf16.mxu0 0
        %1025 = vmatpush1.bf16.msra.mxu0 0
        %1026 = vmatprep.mubr.bf16.mxu0 0
        %1027 = vmatmul.mubr.bf16.gmra.mrb[0].mxu0 %v992
        %v1028 = vpop.f32.mrb[0].mxu0
        %v1029 = vadd.f32 %v977, %v1028
        %v1030 = vpop.f32.mrb[0].mxu0
        %v1031 = vpop.f32.mrb[0].mxu0
        %v1032 = vpop.f32.mrb[0].mxu0
        %1033 = vdwg.mxu0
        %v1034 = vmul.f32 %v1029, 0.35355338
        %v1035 = vld [vmem:[#allocation4] sm:$0xff]
        %v1036 = vpack.c.bf16 %v1034, %v1034
        %v1037 = vpack.c.bf16 %v1029, %v1029
        %1039 = vrot.lane.b32.xlu0 %v1037, 96
        %v1040 = vpop.permute.xlu0 %1039
        %vm1041 = vcmask 64512
        %v1043 = vsel %vm1041, %v1036, 0
        %v1046 = vsel %vm1041, %v1040, 0
        %1048 = vmatprep.subr.bf16.mxu0 0
        %1049 = vmatpush1.bf16.xpose.msra.mxu0 %v1046
        %1050 = vmatprep.subr.bf16.mxu0 0
        %1051 = vmatpush1.bf16.xpose.msra.mxu0 0
        %1052 = vmatprep.subr.bf16.mxu0 0
        %1053 = vmatpush1.bf16.xpose.msra.mxu0 0
        %1054 = vmatprep.subr.bf16.mxu0 0
        %1055 = vmatpush1.bf16.xpose.msra.mxu0 0
        %1056 = vmatprep.subr.bf16.mxu0 0
        %1057 = vmatpush1.bf16.xpose.msra.mxu0 0
        %1058 = vmatprep.subr.bf16.mxu0 0
        %1059 = vmatpush1.bf16.xpose.msra.mxu0 0
        %1060 = vmatprep.subr.bf16.mxu0 0
        %1061 = vmatpush1.bf16.xpose.msra.mxu0 0
        %1062 = vmatprep.subr.bf16.mxu0 0
        %1063 = vmatpush1.bf16.xpose.msra.mxu0 0
        %1064 = vmatprep.subr.bf16.mxu0 0
        %1065 = vmatpush1.bf16.xpose.msra.mxu0 0
        %1066 = vmatprep.subr.bf16.mxu0 0
        %1067 = vmatpush1.bf16.xpose.msra.mxu0 0
        %1068 = vmatprep.subr.bf16.mxu0 0
        %1069 = vmatpush1.bf16.xpose.msra.mxu0 0
        %1070 = vmatprep.subr.bf16.mxu0 0
        %1071 = vmatpush1.bf16.xpose.msra.mxu0 0
        %1072 = vmatprep.subr.bf16.mxu0 0
        %1073 = vmatpush1.bf16.xpose.msra.mxu0 0
        %1074 = vmatprep.subr.bf16.mxu0 0
        %1075 = vmatpush1.bf16.xpose.msra.mxu0 0
        %1076 = vmatprep.subr.bf16.mxu0 0
        %1077 = vmatpush1.bf16.xpose.msra.mxu0 0
        %1078 = vmatprep.subr.bf16.mxu0 0
        %1079 = vmatpush1.bf16.xpose.msra.mxu0 0
        %1080 = vmatprep.mubr.bf16.mxu0 0
        %1081 = vmatmul.mubr.bf16.gmra.mrb[0].mxu0 %v1043
        %v1082 = vpop.f32.mrb[0].mxu0
        %v1083 = vadd.f32 %v1035, %v1082
        %v1084 = vpop.f32.mrb[0].mxu0
        %v1085 = vpop.f32.mrb[0].mxu0
        %v1086 = vpop.f32.mrb[0].mxu0
        %1087 = vdwg.mxu0
        %v1088 = vsel %vm1041, %v1083, -inf
        %1089 = vmax.xlane.f32.xlu0 %v1088
        %v1090 = vpop.xlane.xlu0 %1089
        %v1091 = vsub.f32 %v1083, %v1090
        %v1092 = vmul.f32 %v1091, 1.442695
        %v1093 = vpow.pop %v1092
        %v1094 = vsel %vm1041, %v1093, 0.0
        %1095 = vadd.xlane.f32.xlu0 %v1094
        %v1096 = vpop.xlane.xlu0 %1095
        %v1097 = vrcp.pop %v1096
        %v1098 = vmul.f32 %v1093, %v1097
        %v1099 = vpack.c.bf16 %v1098, %v1098
        %1100 = vrot.lane.b32.xlu0 %v1037, 64
        %v1101 = vpop.permute.xlu0 %1100
        %v1103 = vsel %vm1041, %v1099, 0
        %vm1105 = vcmask 1043456
        %v1107 = vsel %vm1105, %v1101, 0
        %1109 = vmatprep.subr.bf16.mxu0 0
        %1110 = vmatpush1.bf16.msra.mxu0 %v1107
        %1111 = vmatprep.subr.bf16.mxu0 0
        %1112 = vmatpush1.bf16.msra.mxu0 0
        %1113 = vmatprep.subr.bf16.mxu0 0
        %1114 = vmatpush1.bf16.msra.mxu0 0
        %1115 = vmatprep.subr.bf16.mxu0 0
        %1116 = vmatpush1.bf16.msra.mxu0 0
        %1117 = vmatprep.subr.bf16.mxu0 0
        %1118 = vmatpush1.bf16.msra.mxu0 0
        %1119 = vmatprep.subr.bf16.mxu0 0
        %1120 = vmatpush1.bf16.msra.mxu0 0
        %1121 = vmatprep.subr.bf16.mxu0 0
        %1122 = vmatpush1.bf16.msra.mxu0 0
        %1123 = vmatprep.subr.bf16.mxu0 0
        %1124 = vmatpush1.bf16.msra.mxu0 0
        %1125 = vmatprep.subr.bf16.mxu0 0
        %1126 = vmatpush1.bf16.msra.mxu0 0
        %1127 = vmatprep.subr.bf16.mxu0 0
        %1128 = vmatpush1.bf16.msra.mxu0 0
        %1129 = vmatprep.subr.bf16.mxu0 0
        %1130 = vmatpush1.bf16.msra.mxu0 0
        %1131 = vmatprep.subr.bf16.mxu0 0
        %1132 = vmatpush1.bf16.msra.mxu0 0
        %1133 = vmatprep.subr.bf16.mxu0 0
        %1134 = vmatpush1.bf16.msra.mxu0 0
        %1135 = vmatprep.subr.bf16.mxu0 0
        %1136 = vmatpush1.bf16.msra.mxu0 0
        %1137 = vmatprep.subr.bf16.mxu0 0
        %1138 = vmatpush1.bf16.msra.mxu0 0
        %1139 = vmatprep.subr.bf16.mxu0 0
        %1140 = vmatpush1.bf16.msra.mxu0 0
        %1141 = vmatprep.mubr.bf16.mxu0 0
        %1142 = vmatmul.mubr.bf16.gmra.mrb[0].mxu0 %v1103
        %v1143 = vpop.f32.mrb[0].mxu0
        %v1144 = vadd.f32 0.0, %v1143
        %v1145 = vpop.f32.mrb[0].mxu0
        %v1146 = vpop.f32.mrb[0].mxu0
        %v1147 = vpop.f32.mrb[0].mxu0
        %1148 = vdwg.mxu0
        %1149 = vst.msk [vmem:[#allocation3] sm:$0xff] %vm1041, %v1144
        %1151 = vrot.lane.b32.xlu0 %v1036, 120
        %v1152 = vpop.permute.xlu0 %1151
        %1153 = vrot.lane.b32.xlu0 %v1037, 88
        %v1154 = vpop.permute.xlu0 %1153
        %v1156 = vsel %vm1041, %v1152, 0
        %v1159 = vsel %vm1041, %v1154, 0
        %1161 = vmatprep.subr.bf16.mxu0 0
        %1162 = vmatpush1.bf16.xpose.msra.mxu0 %v1159
        %1163 = vmatprep.subr.bf16.mxu0 0
        %1164 = vmatpush1.bf16.xpose.msra.mxu0 0
        %1165 = vmatprep.subr.bf16.mxu0 0
        %1166 = vmatpush1.bf16.xpose.msra.mxu0 0
        %1167 = vmatprep.subr.bf16.mxu0 0
        %1168 = vmatpush1.bf16.xpose.msra.mxu0 0
        %1169 = vmatprep.subr.bf16.mxu0 0
        %1170 = vmatpush1.bf16.xpose.msra.mxu0 0
        %1171 = vmatprep.subr.bf16.mxu0 0
        %1172 = vmatpush1.bf16.xpose.msra.mxu0 0
        %1173 = vmatprep.subr.bf16.mxu0 0
        %1174 = vmatpush1.bf16.xpose.msra.mxu0 0
        %1175 = vmatprep.subr.bf16.mxu0 0
        %1176 = vmatpush1.bf16.xpose.msra.mxu0 0
        %1177 = vmatprep.subr.bf16.mxu0 0
        %1178 = vmatpush1.bf16.xpose.msra.mxu0 0
        %1179 = vmatprep.subr.bf16.mxu0 0
        %1180 = vmatpush1.bf16.xpose.msra.mxu0 0
        %1181 = vmatprep.subr.bf16.mxu0 0
        %1182 = vmatpush1.bf16.xpose.msra.mxu0 0
        %1183 = vmatprep.subr.bf16.mxu0 0
        %1184 = vmatpush1.bf16.xpose.msra.mxu0 0
        %1185 = vmatprep.subr.bf16.mxu0 0
        %1186 = vmatpush1.bf16.xpose.msra.mxu0 0
        %1187 = vmatprep.subr.bf16.mxu0 0
        %1188 = vmatpush1.bf16.xpose.msra.mxu0 0
        %1189 = vmatprep.subr.bf16.mxu0 0
        %1190 = vmatpush1.bf16.xpose.msra.mxu0 0
        %1191 = vmatprep.subr.bf16.mxu0 0
        %1192 = vmatpush1.bf16.xpose.msra.mxu0 0
        %1193 = vmatprep.mubr.bf16.mxu0 0
        %1194 = vmatmul.mubr.bf16.gmra.mrb[0].mxu0 %v1156
        %v1195 = vpop.f32.mrb[0].mxu0
        %v1196 = vadd.f32 %v1035, %v1195
        %v1197 = vpop.f32.mrb[0].mxu0
        %v1198 = vpop.f32.mrb[0].mxu0
        %v1199 = vpop.f32.mrb[0].mxu0
        %1200 = vdwg.mxu0
        %v1201 = vsel %vm1041, %v1196, -inf
        %1202 = vmax.xlane.f32.xlu0 %v1201
        %v1203 = vpop.xlane.xlu0 %1202
        %v1204 = vsub.f32 %v1196, %v1203
        %v1205 = vmul.f32 %v1204, 1.442695
        %v1206 = vpow.pop %v1205
        %v1207 = vsel %vm1041, %v1206, 0.0
        %1208 = vadd.xlane.f32.xlu0 %v1207
        %v1209 = vpop.xlane.xlu0 %1208
        %v1210 = vrcp.pop %v1209
        %v1211 = vmul.f32 %v1206, %v1210
        %v1212 = vpack.c.bf16 %v1211, %v1211
        %1213 = vrot.lane.b32.xlu0 %v1037, 56
        %v1214 = vpop.permute.xlu0 %1213
        %v1216 = vsel %vm1041, %v1212, 0
        %v1219 = vsel %vm1105, %v1214, 0
        %1221 = vmatprep.subr.bf16.mxu0 0
        %1222 = vmatpush1.bf16.msra.mxu0 %v1219
        %1223 = vmatprep.subr.bf16.mxu0 0
        %1224 = vmatpush1.bf16.msra.mxu0 0
        %1225 = vmatprep.subr.bf16.mxu0 0
        %1226 = vmatpush1.bf16.msra.mxu0 0
        %1227 = vmatprep.subr.bf16.mxu0 0
        %1228 = vmatpush1.bf16.msra.mxu0 0
        %1229 = vmatprep.subr.bf16.mxu0 0
        %1230 = vmatpush1.bf16.msra.mxu0 0
        %1231 = vmatprep.subr.bf16.mxu0 0
        %1232 = vmatpush1.bf16.msra.mxu0 0
        %1233 = vmatprep.subr.bf16.mxu0 0
        %1234 = vmatpush1.bf16.msra.mxu0 0
        %1235 = vmatprep.subr.bf16.mxu0 0
        %1236 = vmatpush1.bf16.msra.mxu0 0
        %1237 = vmatprep.subr.bf16.mxu0 0
        %1238 = vmatpush1.bf16.msra.mxu0 0
        %1239 = vmatprep.subr.bf16.mxu0 0
        %1240 = vmatpush1.bf16.msra.mxu0 0
        %1241 = vmatprep.subr.bf16.mxu0 0
        %1242 = vmatpush1.bf16.msra.mxu0 0
        %1243 = vmatprep.subr.bf16.mxu0 0
        %1244 = vmatpush1.bf16.msra.mxu0 0
        %1245 = vmatprep.subr.bf16.mxu0 0
        %1246 = vmatpush1.bf16.msra.mxu0 0
        %1247 = vmatprep.subr.bf16.mxu0 0
        %1248 = vmatpush1.bf16.msra.mxu0 0
        %1249 = vmatprep.subr.bf16.mxu0 0
        %1250 = vmatpush1.bf16.msra.mxu0 0
        %1251 = vmatprep.subr.bf16.mxu0 0
        %1252 = vmatpush1.bf16.msra.mxu0 0
        %1253 = vmatprep.mubr.bf16.mxu0 0
        %1254 = vmatmul.mubr.bf16.gmra.mrb[0].mxu0 %v1216
        %v1255 = vpop.f32.mrb[0].mxu0
        %v1256 = vadd.f32 0.0, %v1255
        %v1257 = vpop.f32.mrb[0].mxu0
        %v1258 = vpop.f32.mrb[0].mxu0
        %v1259 = vpop.f32.mrb[0].mxu0
        %1260 = vdwg.mxu0
        %1262 = vrot.lane.b32.xlu0 %v1256, 8
        %v1263 = vpop.permute.xlu0 %1262
        %vm1265 = vcmask 130112
        %1266 = vst.msk [vmem:[#allocation3] sm:$0xff] %vm1265, %v1263
        %1267 = vrot.lane.b32.xlu0 %v1036, 112
        %v1268 = vpop.permute.xlu0 %1267
        %1269 = vrot.lane.b32.xlu0 %v1037, 80
        %v1270 = vpop.permute.xlu0 %1269
        %v1272 = vsel %vm1041, %v1268, 0
        %v1275 = vsel %vm1041, %v1270, 0
        %1277 = vmatprep.subr.bf16.mxu0 0
        %1278 = vmatpush1.bf16.xpose.msra.mxu0 %v1275
        %1279 = vmatprep.subr.bf16.mxu0 0
        %1280 = vmatpush1.bf16.xpose.msra.mxu0 0
        %1281 = vmatprep.subr.bf16.mxu0 0
        %1282 = vmatpush1.bf16.xpose.msra.mxu0 0
        %1283 = vmatprep.subr.bf16.mxu0 0
        %1284 = vmatpush1.bf16.xpose.msra.mxu0 0
        %1285 = vmatprep.subr.bf16.mxu0 0
        %1286 = vmatpush1.bf16.xpose.msra.mxu0 0
        %1287 = vmatprep.subr.bf16.mxu0 0
        %1288 = vmatpush1.bf16.xpose.msra.mxu0 0
        %1289 = vmatprep.subr.bf16.mxu0 0
        %1290 = vmatpush1.bf16.xpose.msra.mxu0 0
        %1291 = vmatprep.subr.bf16.mxu0 0
        %1292 = vmatpush1.bf16.xpose.msra.mxu0 0
        %1293 = vmatprep.subr.bf16.mxu0 0
        %1294 = vmatpush1.bf16.xpose.msra.mxu0 0
        %1295 = vmatprep.subr.bf16.mxu0 0
        %1296 = vmatpush1.bf16.xpose.msra.mxu0 0
        %1297 = vmatprep.subr.bf16.mxu0 0
        %1298 = vmatpush1.bf16.xpose.msra.mxu0 0
        %1299 = vmatprep.subr.bf16.mxu0 0
        %1300 = vmatpush1.bf16.xpose.msra.mxu0 0
        %1301 = vmatprep.subr.bf16.mxu0 0
        %1302 = vmatpush1.bf16.xpose.msra.mxu0 0
        %1303 = vmatprep.subr.bf16.mxu0 0
        %1304 = vmatpush1.bf16.xpose.msra.mxu0 0
        %1305 = vmatprep.subr.bf16.mxu0 0
        %1306 = vmatpush1.bf16.xpose.msra.mxu0 0
        %1307 = vmatprep.subr.bf16.mxu0 0
        %1308 = vmatpush1.bf16.xpose.msra.mxu0 0
        %1309 = vmatprep.mubr.bf16.mxu0 0
        %1310 = vmatmul.mubr.bf16.gmra.mrb[0].mxu0 %v1272
        %v1311 = vpop.f32.mrb[0].mxu0
        %v1312 = vadd.f32 %v1035, %v1311
        %v1313 = vpop.f32.mrb[0].mxu0
        %v1314 = vpop.f32.mrb[0].mxu0
        %v1315 = vpop.f32.mrb[0].mxu0
        %1316 = vdwg.mxu0
        %v1317 = vsel %vm1041, %v1312, -inf
        %1318 = vmax.xlane.f32.xlu0 %v1317
        %v1319 = vpop.xlane.xlu0 %1318
        %v1320 = vsub.f32 %v1312, %v1319
        %v1321 = vmul.f32 %v1320, 1.442695
        %v1322 = vpow.pop %v1321
        %v1323 = vsel %vm1041, %v1322, 0.0
        %1324 = vadd.xlane.f32.xlu0 %v1323
        %v1325 = vpop.xlane.xlu0 %1324
        %v1326 = vrcp.pop %v1325
        %v1327 = vmul.f32 %v1322, %v1326
        %v1328 = vpack.c.bf16 %v1327, %v1327
        %1329 = vrot.lane.b32.xlu0 %v1037, 48
        %v1330 = vpop.permute.xlu0 %1329
        %v1332 = vsel %vm1041, %v1328, 0
        %v1335 = vsel %vm1105, %v1330, 0
        %1337 = vmatprep.subr.bf16.mxu0 0
        %1338 = vmatpush1.bf16.msra.mxu0 %v1335
        %1339 = vmatprep.subr.bf16.mxu0 0
        %1340 = vmatpush1.bf16.msra.mxu0 0
        %1341 = vmatprep.subr.bf16.mxu0 0
        %1342 = vmatpush1.bf16.msra.mxu0 0
        %1343 = vmatprep.subr.bf16.mxu0 0
        %1344 = vmatpush1.bf16.msra.mxu0 0
        %1345 = vmatprep.subr.bf16.mxu0 0
        %1346 = vmatpush1.bf16.msra.mxu0 0
        %1347 = vmatprep.subr.bf16.mxu0 0
        %1348 = vmatpush1.bf16.msra.mxu0 0
        %1349 = vmatprep.subr.bf16.mxu0 0
        %1350 = vmatpush1.bf16.msra.mxu0 0
        %1351 = vmatprep.subr.bf16.mxu0 0
        %1352 = vmatpush1.bf16.msra.mxu0 0
        %1353 = vmatprep.subr.bf16.mxu0 0
        %1354 = vmatpush1.bf16.msra.mxu0 0
        %1355 = vmatprep.subr.bf16.mxu0 0
        %1356 = vmatpush1.bf16.msra.mxu0 0
        %1357 = vmatprep.subr.bf16.mxu0 0
        %1358 = vmatpush1.bf16.msra.mxu0 0
        %1359 = vmatprep.subr.bf16.mxu0 0
        %1360 = vmatpush1.bf16.msra.mxu0 0
        %1361 = vmatprep.subr.bf16.mxu0 0
        %1362 = vmatpush1.bf16.msra.mxu0 0
        %1363 = vmatprep.subr.bf16.mxu0 0
        %1364 = vmatpush1.bf16.msra.mxu0 0
        %1365 = vmatprep.subr.bf16.mxu0 0
        %1366 = vmatpush1.bf16.msra.mxu0 0
        %1367 = vmatprep.subr.bf16.mxu0 0
        %1368 = vmatpush1.bf16.msra.mxu0 0
        %1369 = vmatprep.mubr.bf16.mxu0 0
        %1370 = vmatmul.mubr.bf16.gmra.mrb[0].mxu0 %v1332
        %v1371 = vpop.f32.mrb[0].mxu0
        %v1372 = vadd.f32 0.0, %v1371
        %v1373 = vpop.f32.mrb[0].mxu0
        %v1374 = vpop.f32.mrb[0].mxu0
        %v1375 = vpop.f32.mrb[0].mxu0
        %1376 = vdwg.mxu0
        %1378 = vrot.lane.b32.xlu0 %v1372, 16
        %v1379 = vpop.permute.xlu0 %1378
        %vm1381 = vcmask 195712
        %1382 = vst.msk [vmem:[#allocation3] sm:$0xff] %vm1381, %v1379
        %1383 = vrot.lane.b32.xlu0 %v1036, 104
        %v1384 = vpop.permute.xlu0 %1383
        %1385 = vrot.lane.b32.xlu0 %v1037, 72
        %v1386 = vpop.permute.xlu0 %1385
        %v1388 = vsel %vm1041, %v1384, 0
        %v1391 = vsel %vm1041, %v1386, 0
        %1393 = vmatprep.subr.bf16.mxu0 0
        %1394 = vmatpush1.bf16.xpose.msra.mxu0 %v1391
        %1395 = vmatprep.subr.bf16.mxu0 0
        %1396 = vmatpush1.bf16.xpose.msra.mxu0 0
        %1397 = vmatprep.subr.bf16.mxu0 0
        %1398 = vmatpush1.bf16.xpose.msra.mxu0 0
        %1399 = vmatprep.subr.bf16.mxu0 0
        %1400 = vmatpush1.bf16.xpose.msra.mxu0 0
        %1401 = vmatprep.subr.bf16.mxu0 0
        %1402 = vmatpush1.bf16.xpose.msra.mxu0 0
        %1403 = vmatprep.subr.bf16.mxu0 0
        %1404 = vmatpush1.bf16.xpose.msra.mxu0 0
        %1405 = vmatprep.subr.bf16.mxu0 0
        %1406 = vmatpush1.bf16.xpose.msra.mxu0 0
        %1407 = vmatprep.subr.bf16.mxu0 0
        %1408 = vmatpush1.bf16.xpose.msra.mxu0 0
        %1409 = vmatprep.subr.bf16.mxu0 0
        %1410 = vmatpush1.bf16.xpose.msra.mxu0 0
        %1411 = vmatprep.subr.bf16.mxu0 0
        %1412 = vmatpush1.bf16.xpose.msra.mxu0 0
        %1413 = vmatprep.subr.bf16.mxu0 0
        %1414 = vmatpush1.bf16.xpose.msra.mxu0 0
        %1415 = vmatprep.subr.bf16.mxu0 0
        %1416 = vmatpush1.bf16.xpose.msra.mxu0 0
        %1417 = vmatprep.subr.bf16.mxu0 0
        %1418 = vmatpush1.bf16.xpose.msra.mxu0 0
        %1419 = vmatprep.subr.bf16.mxu0 0
        %1420 = vmatpush1.bf16.xpose.msra.mxu0 0
        %1421 = vmatprep.subr.bf16.mxu0 0
        %1422 = vmatpush1.bf16.xpose.msra.mxu0 0
        %1423 = vmatprep.subr.bf16.mxu0 0
        %1424 = vmatpush1.bf16.xpose.msra.mxu0 0
        %1425 = vmatprep.mubr.bf16.mxu0 0
        %1426 = vmatmul.mubr.bf16.gmra.mrb[0].mxu0 %v1388
        %v1427 = vpop.f32.mrb[0].mxu0
        %v1428 = vadd.f32 %v1035, %v1427
        %v1429 = vpop.f32.mrb[0].mxu0
        %v1430 = vpop.f32.mrb[0].mxu0
        %v1431 = vpop.f32.mrb[0].mxu0
        %1432 = vdwg.mxu0
        %v1433 = vsel %vm1041, %v1428, -inf
        %1434 = vmax.xlane.f32.xlu0 %v1433
        %v1435 = vpop.xlane.xlu0 %1434
        %v1436 = vsub.f32 %v1428, %v1435
        %v1437 = vmul.f32 %v1436, 1.442695
        %v1438 = vpow.pop %v1437
        %v1439 = vsel %vm1041, %v1438, 0.0
        %1440 = vadd.xlane.f32.xlu0 %v1439
        %v1441 = vpop.xlane.xlu0 %1440
        %v1442 = vrcp.pop %v1441
        %v1443 = vmul.f32 %v1438, %v1442
        %v1444 = vpack.c.bf16 %v1443, %v1443
        %1445 = vrot.lane.b32.xlu0 %v1037, 40
        %v1446 = vpop.permute.xlu0 %1445
        %v1448 = vsel %vm1041, %v1444, 0
        %v1451 = vsel %vm1105, %v1446, 0
        %1453 = vmatprep.subr.bf16.mxu0 0
        %1454 = vmatpush1.bf16.msra.mxu0 %v1451
        %1455 = vmatprep.subr.bf16.mxu0 0
        %1456 = vmatpush1.bf16.msra.mxu0 0
        %1457 = vmatprep.subr.bf16.mxu0 0
        %1458 = vmatpush1.bf16.msra.mxu0 0
        %1459 = vmatprep.subr.bf16.mxu0 0
        %1460 = vmatpush1.bf16.msra.mxu0 0
        %1461 = vmatprep.subr.bf16.mxu0 0
        %1462 = vmatpush1.bf16.msra.mxu0 0
        %1463 = vmatprep.subr.bf16.mxu0 0
        %1464 = vmatpush1.bf16.msra.mxu0 0
        %1465 = vmatprep.subr.bf16.mxu0 0
        %1466 = vmatpush1.bf16.msra.mxu0 0
        %1467 = vmatprep.subr.bf16.mxu0 0
        %1468 = vmatpush1.bf16.msra.mxu0 0
        %1469 = vmatprep.subr.bf16.mxu0 0
        %1470 = vmatpush1.bf16.msra.mxu0 0
        %1471 = vmatprep.subr.bf16.mxu0 0
        %1472 = vmatpush1.bf16.msra.mxu0 0
        %1473 = vmatprep.subr.bf16.mxu0 0
        %1474 = vmatpush1.bf16.msra.mxu0 0
        %1475 = vmatprep.subr.bf16.mxu0 0
        %1476 = vmatpush1.bf16.msra.mxu0 0
        %1477 = vmatprep.subr.bf16.mxu0 0
        %1478 = vmatpush1.bf16.msra.mxu0 0
        %1479 = vmatprep.subr.bf16.mxu0 0
        %1480 = vmatpush1.bf16.msra.mxu0 0
        %1481 = vmatprep.subr.bf16.mxu0 0
        %1482 = vmatpush1.bf16.msra.mxu0 0
        %1483 = vmatprep.subr.bf16.mxu0 0
        %1484 = vmatpush1.bf16.msra.mxu0 0
        %1485 = vmatprep.mubr.bf16.mxu0 0
        %1486 = vmatmul.mubr.bf16.gmra.mrb[0].mxu0 %v1448
        %v1487 = vpop.f32.mrb[0].mxu0
        %v1488 = vadd.f32 0.0, %v1487
        %v1489 = vpop.f32.mrb[0].mxu0
        %v1490 = vpop.f32.mrb[0].mxu0
        %v1491 = vpop.f32.mrb[0].mxu0
        %1492 = vdwg.mxu0
        %1494 = vrot.lane.b32.xlu0 %v1488, 24
        %v1495 = vpop.permute.xlu0 %1494
        %vm1497 = vcmask 261312
        %1498 = vst.msk [vmem:[#allocation3] sm:$0xff] %vm1497, %v1495
        %v1499 = vld [vmem:[#allocation3] sm:$0xff]
        %v1500 = vpack.c.bf16 %v1499, %v1499
        %v1501 = vld [vmem:[%s804] sm:$0xf]
        %v1502 = vld [vmem:[%s804 + $0x4] sm:$0xf]
        %v1503 = vld [vmem:[%s804 + $0x8] sm:$0xf]
        %v1504 = vld [vmem:[%s804 + $0xc] sm:$0xf]
        %v1505 = vld [vmem:[%s807] sm:$0x1]
        %v1507 = vlaneseq
        %v1508 = vshrl.u32 %v1507, 7
        %v1509 = vsub.s32 0, %v1508
        %v1510 = vrot.slane %v1505, %v1509
        %v1516 = vunpack.c.l.b16 %v1501
        %v1517 = vunpack.c.l.b16 %v1502
        %v1518 = vunpack.c.l.b16 %v1503
        %v1519 = vunpack.c.l.b16 %v1504
        %v1520 = vpack.c.b16 %v1517, %v1516
        %v1521 = vpack.c.b16 %v1519, %v1518
        %v1525 = vsel %vm938, %v1500, 0
        %1527 = vmatprep.subr.bf16.mxu0 0
        %1528 = vmatpush1.bf16.msra.mxu0 %v1520
        %1529 = vmatprep.subr.bf16.mxu0 0
        %1530 = vmatpush1.bf16.msra.mxu0 %v1521
        %1531 = vmatprep.subr.bf16.mxu0 0
        %1532 = vmatpush1.bf16.msra.mxu0 0
        %1533 = vmatprep.subr.bf16.mxu0 0
        %1534 = vmatpush1.bf16.msra.mxu0 0
        %1535 = vmatprep.subr.bf16.mxu0 0
        %1536 = vmatpush1.bf16.msra.mxu0 0
        %1537 = vmatprep.subr.bf16.mxu0 0
        %1538 = vmatpush1.bf16.msra.mxu0 0
        %1539 = vmatprep.subr.bf16.mxu0 0
        %1540 = vmatpush1.bf16.msra.mxu0 0
        %1541 = vmatprep.subr.bf16.mxu0 0
        %1542 = vmatpush1.bf16.msra.mxu0 0
        %1543 = vmatprep.subr.bf16.mxu0 0
        %1544 = vmatpush1.bf16.msra.mxu0 0
        %1545 = vmatprep.subr.bf16.mxu0 0
        %1546 = vmatpush1.bf16.msra.mxu0 0
        %1547 = vmatprep.subr.bf16.mxu0 0
        %1548 = vmatpush1.bf16.msra.mxu0 0
        %1549 = vmatprep.subr.bf16.mxu0 0
        %1550 = vmatpush1.bf16.msra.mxu0 0
        %1551 = vmatprep.subr.bf16.mxu0 0
        %1552 = vmatpush1.bf16.msra.mxu0 0
        %1553 = vmatprep.subr.bf16.mxu0 0
        %1554 = vmatpush1.bf16.msra.mxu0 0
        %1555 = vmatprep.subr.bf16.mxu0 0
        %1556 = vmatpush1.bf16.msra.mxu0 0
        %1557 = vmatprep.subr.bf16.mxu0 0
        %1558 = vmatpush1.bf16.msra.mxu0 0
        %1559 = vmatprep.mubr.bf16.mxu0 0
        %1560 = vmatmul.mubr.bf16.gmra.mrb[0].mxu0 %v1525
        %v1561 = vpop.f32.mrb[0].mxu0
        %v1562 = vadd.f32 %v1510, %v1561
        %v1563 = vpop.f32.mrb[0].mxu0
        %v1564 = vpop.f32.mrb[0].mxu0
        %v1565 = vpop.f32.mrb[0].mxu0
        %1566 = vdwg.mxu0
        %v1567 = vadd.f32 %v935, %v1562
        %v1568 = vld [vmem:[%s810] sm:$0x1]
        %v1569 = vld [vmem:[%s813] sm:$0x1]
        %v1570 = vsel %vm938, %v1567, 0.0
        %1571 = vadd.xlane.f32.xlu0 %v1570
        %v1572 = vpop.xlane.xlu0 %1571
        %v1573 = vmul.f32 %v1572, %v942
        %v1574 = vsub.f32 %v1567, %v1573
        %v1575 = vmul.f32 %v1574, %v1574
        %v1576 = vsel %vm938, %v1575, 0.0
        %1577 = vadd.xlane.f32.xlu0 %v1576
        %v1578 = vpop.xlane.xlu0 %1577
        %v1579 = vmul.f32 %v1578, %v942
        %v1580 = vadd.f32 %v1579, 1e-05
        %v1581 = vrsqrt.pop %v1580
        %v1582 = vmul.f32 %v1574, %v1581
        %v1584 = vlaneseq
        %v1585 = vshrl.u32 %v1584, 7
        %v1586 = vsub.s32 0, %v1585
        %v1587 = vrot.slane %v1568, %v1586
        %v1589 = vmul.f32 %v1582, %v1587
        %v1591 = vlaneseq
        %v1592 = vshrl.u32 %v1591, 7
        %v1593 = vsub.s32 0, %v1592
        %v1594 = vrot.slane %v1569, %v1593
        %v1596 = vadd.f32 %v1589, %v1594
        %v1597 = vpack.c.bf16 %v1596, %v1596
        %v1598 = vld [vmem:[%s818] sm:$0xf]
        %v1599 = vld [vmem:[%s818 + $0x4] sm:$0xf]
        %v1600 = vld [vmem:[%s818 + $0x8] sm:$0xf]
        %v1601 = vld [vmem:[%s818 + $0xc] sm:$0xf]
        %v1602 = vld [vmem:[%s821] sm:$0x1]
        %v1604 = vlaneseq
        %v1605 = vshrl.u32 %v1604, 7
        %v1606 = vsub.s32 0, %v1605
        %v1607 = vrot.slane %v1602, %v1606
        %v1613 = vunpack.c.l.b16 %v1598
        %v1614 = vunpack.c.l.b16 %v1599
        %v1615 = vunpack.c.l.b16 %v1600
        %v1616 = vunpack.c.l.b16 %v1601
        %v1617 = vpack.c.b16 %v1614, %v1613
        %v1618 = vpack.c.b16 %v1616, %v1615
        %v1622 = vsel %vm938, %v1597, 0
        %1624 = vmatprep.subr.bf16.mxu0 0
        %1625 = vmatpush1.bf16.msra.mxu0 %v1617
        %1626 = vmatprep.subr.bf16.mxu0 0
        %1627 = vmatpush1.bf16.msra.mxu0 %v1618
        %1628 = vmatprep.subr.bf16.mxu0 0
        %1629 = vmatpush1.bf16.msra.mxu0 0
        %1630 = vmatprep.subr.bf16.mxu0 0
        %1631 = vmatpush1.bf16.msra.mxu0 0
        %1632 = vmatprep.subr.bf16.mxu0 0
        %1633 = vmatpush1.bf16.msra.mxu0 0
        %1634 = vmatprep.subr.bf16.mxu0 0
        %1635 = vmatpush1.bf16.msra.mxu0 0
        %1636 = vmatprep.subr.bf16.mxu0 0
        %1637 = vmatpush1.bf16.msra.mxu0 0
        %1638 = vmatprep.subr.bf16.mxu0 0
        %1639 = vmatpush1.bf16.msra.mxu0 0
        %1640 = vmatprep.subr.bf16.mxu0 0
        %1641 = vmatpush1.bf16.msra.mxu0 0
        %1642 = vmatprep.subr.bf16.mxu0 0
        %1643 = vmatpush1.bf16.msra.mxu0 0
        %1644 = vmatprep.subr.bf16.mxu0 0
        %1645 = vmatpush1.bf16.msra.mxu0 0
        %1646 = vmatprep.subr.bf16.mxu0 0
        %1647 = vmatpush1.bf16.msra.mxu0 0
        %1648 = vmatprep.subr.bf16.mxu0 0
        %1649 = vmatpush1.bf16.msra.mxu0 0
        %1650 = vmatprep.subr.bf16.mxu0 0
        %1651 = vmatpush1.bf16.msra.mxu0 0
        %1652 = vmatprep.subr.bf16.mxu0 0
        %1653 = vmatpush1.bf16.msra.mxu0 0
        %1654 = vmatprep.subr.bf16.mxu0 0
        %1655 = vmatpush1.bf16.msra.mxu0 0
        %1656 = vmatprep.mubr.bf16.mxu0 0
        %1657 = vmatmul.mubr.bf16.gmra.mrb[0].mxu0 %v1622
        %v1658 = vpop.f32.mrb[0].mxu0
        %v1659 = vadd.f32 %v1607, %v1658
        %v1660 = vpop.f32.mrb[0].mxu0
        %v1661 = vpop.f32.mrb[0].mxu0
        %v1662 = vpop.f32.mrb[0].mxu0
        %1663 = vdwg.mxu0
        %v1664 = vmul.f32 %v1659, 0.5
        %v1665 = vmul.f32 %v1659, 0.044715
        %v1666 = vmul.f32 %v1665, %v1659
        %v1667 = vmul.f32 %v1666, %v1659
        %v1668 = vadd.f32 %v1659, %v1667
        %v1669 = vmul.f32 %v1668, 0.7978846
        %v1670 = vtanh.pop %v1669
        %v1671 = vadd.f32 %v1670, 1.0
        %v1672 = vmul.f32 %v1664, %v1671
        %v1673 = vpack.c.bf16 %v1672, %v1672
        %v1674 = vld [vmem:[%s826] sm:$0xf]
        %v1675 = vld [vmem:[%s826 + $0x4] sm:$0xf]
        %v1676 = vld [vmem:[%s826 + $0x8] sm:$0xf]
        %v1677 = vld [vmem:[%s826 + $0xc] sm:$0xf]
        %v1678 = vld [vmem:[%s826 + $0x10] sm:$0xf]
        %v1679 = vld [vmem:[%s826 + $0x14] sm:$0xf]
        %v1680 = vld [vmem:[%s826 + $0x18] sm:$0xf]
        %v1681 = vld [vmem:[%s826 + $0x1c] sm:$0xf]
        %v1682 = vld [vmem:[%s826 + $0x20] sm:$0xf]
        %v1683 = vld [vmem:[%s826 + $0x24] sm:$0xf]
        %v1684 = vld [vmem:[%s826 + $0x28] sm:$0xf]
        %v1685 = vld [vmem:[%s826 + $0x2c] sm:$0xf]
        %v1686 = vld [vmem:[%s826 + $0x30] sm:$0xf]
        %v1687 = vld [vmem:[%s826 + $0x34] sm:$0xf]
        %v1688 = vld [vmem:[%s826 + $0x38] sm:$0xf]
        %v1689 = vld [vmem:[%s826 + $0x3c] sm:$0xf]
        %v1706 = vunpack.c.l.b16 %v1674
        %v1707 = vunpack.c.l.b16 %v1675
        %v1708 = vunpack.c.l.b16 %v1676
        %v1709 = vunpack.c.l.b16 %v1677
        %v1710 = vunpack.c.l.b16 %v1678
        %v1711 = vunpack.c.l.b16 %v1679
        %v1712 = vunpack.c.l.b16 %v1680
        %v1713 = vunpack.c.l.b16 %v1681
        %v1714 = vunpack.c.l.b16 %v1682
        %v1715 = vunpack.c.l.b16 %v1683
        %v1716 = vunpack.c.l.b16 %v1684
        %v1717 = vunpack.c.l.b16 %v1685
        %v1718 = vunpack.c.l.b16 %v1686
        %v1719 = vunpack.c.l.b16 %v1687
        %v1720 = vunpack.c.l.b16 %v1688
        %v1721 = vunpack.c.l.b16 %v1689
        %v1722 = vpack.c.b16 %v1707, %v1706
        %v1723 = vpack.c.b16 %v1709, %v1708
        %v1724 = vpack.c.b16 %v1711, %v1710
        %v1725 = vpack.c.b16 %v1713, %v1712
        %v1726 = vpack.c.b16 %v1715, %v1714
        %v1727 = vpack.c.b16 %v1717, %v1716
        %v1728 = vpack.c.b16 %v1719, %v1718
        %v1729 = vpack.c.b16 %v1721, %v1720
        %1738 = vmatprep.subr.bf16.mxu0 0
        %1739 = vmatpush1.bf16.msra.mxu0 %v1722
        %1740 = vmatprep.subr.bf16.mxu0 0
        %1741 = vmatpush1.bf16.msra.mxu0 %v1723
        %1742 = vmatprep.subr.bf16.mxu0 0
        %1743 = vmatpush1.bf16.msra.mxu0 %v1724
        %1744 = vmatprep.subr.bf16.mxu0 0
        %1745 = vmatpush1.bf16.msra.mxu0 %v1725
        %1746 = vmatprep.subr.bf16.mxu0 0
        %1747 = vmatpush1.bf16.msra.mxu0 %v1726
        %1748 = vmatprep.subr.bf16.mxu0 0
        %1749 = vmatpush1.bf16.msra.mxu0 %v1727
        %1750 = vmatprep.subr.bf16.mxu0 0
        %1751 = vmatpush1.bf16.msra.mxu0 %v1728
        %1752 = vmatprep.subr.bf16.mxu0 0
        %1753 = vmatpush1.bf16.msra.mxu0 %v1729
        %1754 = vmatprep.subr.bf16.mxu0 0
        %1755 = vmatpush1.bf16.msra.mxu0 0
        %1756 = vmatprep.subr.bf16.mxu0 0
        %1757 = vmatpush1.bf16.msra.mxu0 0
        %1758 = vmatprep.subr.bf16.mxu0 0
        %1759 = vmatpush1.bf16.msra.mxu0 0
        %1760 = vmatprep.subr.bf16.mxu0 0
        %1761 = vmatpush1.bf16.msra.mxu0 0
        %1762 = vmatprep.subr.bf16.mxu0 0
        %1763 = vmatpush1.bf16.msra.mxu0 0
        %1764 = vmatprep.subr.bf16.mxu0 0
        %1765 = vmatpush1.bf16.msra.mxu0 0
        %1766 = vmatprep.subr.bf16.mxu0 0
        %1767 = vmatpush1.bf16.msra.mxu0 0
        %1768 = vmatprep.subr.bf16.mxu0 0
        %1769 = vmatpush1.bf16.msra.mxu0 0
        %1770 = vmatprep.mubr.bf16.mxu0 0
        %1771 = vmatmul.mubr.bf16.gmra.mrb[0].mxu0 %v1673
        %v1772 = vpop.f32.mrb[0].mxu0
        %v1773 = vadd.f32 0.0, %v1772
        %v1774 = vpop.f32.mrb[0].mxu0
        %v1775 = vpop.f32.mrb[0].mxu0
        %v1776 = vpop.f32.mrb[0].mxu0
        %1777 = vdwg.mxu0
        %v1778 = vadd.f32 %v1567, %v1773
        %v1779 = vld [vmem:[%s829] sm:$0x1]
        %v1781 = vlaneseq
        %v1782 = vshrl.u32 %v1781, 7
        %v1783 = vsub.s32 0, %v1782
        %v1784 = vrot.slane %v1779, %v1783
        %v1786 = vadd.f32 %v1778, %v1784
        %1787 = vst.msk [vmem:[#allocation2] sm:$0xff] %vm938, %v1786
        %p1788 = scmp.eq.s32.totalorder %s41, 1
        // Predicated region
        $region105: #{tpu_custom_call.1} parent=99 // pred_check
          %p1789 = pneg %p1788
        $region106: #{tpu_custom_call.1} parent=99 // pred_check_branch
          %1791 = sbr.rel (%p1789) target = $region108
        $region107: #{tpu_custom_call.1} parent=99 // pred_region
          %v1792 = vld [vmem:[%s16] sm:$0x1]
          %v1793 = vld [vmem:[%s17] sm:$0x1]
          %v1794 = vsel %vm938, %v1786, 0.0
          %1795 = vadd.xlane.f32.xlu0 %v1794
          %v1796 = vpop.xlane.xlu0 %1795
          %v1797 = vmul.f32 %v1796, %v942
          %v1798 = vsub.f32 %v1786, %v1797
          %v1799 = vmul.f32 %v1798, %v1798
          %v1800 = vsel %vm938, %v1799, 0.0
          %1801 = vadd.xlane.f32.xlu0 %v1800
          %v1802 = vpop.xlane.xlu0 %1801
          %v1803 = vmul.f32 %v1802, %v942
          %v1804 = vadd.f32 %v1803, 1e-05
          %v1805 = vrsqrt.pop %v1804
          %v1806 = vmul.f32 %v1798, %v1805
          %v1808 = vlaneseq
          %v1809 = vshrl.u32 %v1808, 7
          %v1810 = vsub.s32 0, %v1809
          %v1811 = vrot.slane %v1792, %v1810
          %v1813 = vmul.f32 %v1806, %v1811
          %v1815 = vlaneseq
          %v1816 = vshrl.u32 %v1815, 7
          %v1817 = vsub.s32 0, %v1816
          %v1818 = vrot.slane %v1793, %v1817
          %v1820 = vadd.f32 %v1813, %v1818
          %v1821 = vld [vmem:[%s18] sm:$0x1]
          %v1822 = vunpack.c.l.bf16 %v1821
          %v1823 = vld [vmem:[#allocation5] sm:$0x1]
          %1825 = vset.pattern.permute.xlu0 0
          %1826 = vperm.xlu0 %1825, %v1823
          %v1827 = vpop.permute.xlu0 %1826
          %v1829 = vlaneseq
          %v1830 = vshrl.u32 %v1829, 7
          %v1831 = vsub.s32 0, %v1830
          %v1832 = vrot.slane %v1827, %v1831
          %v1834 = vsel %vm938, %v1822, 0
          %v1837 = vsel %vm938, %v1820, 0
          %1839 = vmatprep.subr.mxu0 0.0
          %1840 = vmatpush1.xpose.msra.mxu0 %v1837
          %1841 = vmatprep.subr.mxu0 0.0
          %1842 = vmatpush1.xpose.msra.mxu0 0.0
          %1843 = vmatprep.subr.mxu0 0.0
          %1844 = vmatpush1.xpose.msra.mxu0 0.0
          %1845 = vmatprep.subr.mxu0 0.0
          %1846 = vmatpush1.xpose.msra.mxu0 0.0
          %1847 = vmatprep.subr.mxu0 0.0
          %1848 = vmatpush1.xpose.msra.mxu0 0.0
          %1849 = vmatprep.subr.mxu0 0.0
          %1850 = vmatpush1.xpose.msra.mxu0 0.0
          %1851 = vmatprep.subr.mxu0 0.0
          %1852 = vmatpush1.xpose.msra.mxu0 0.0
          %1853 = vmatprep.subr.mxu0 0.0
          %1854 = vmatpush1.xpose.msra.mxu0 0.0
          %1855 = vmatprep.subr.mxu0 0.0
          %1856 = vmatpush1.xpose.msra.mxu0 0.0
          %1857 = vmatprep.subr.mxu0 0.0
          %1858 = vmatpush1.xpose.msra.mxu0 0.0
          %1859 = vmatprep.subr.mxu0 0.0
          %1860 = vmatpush1.xpose.msra.mxu0 0.0
          %1861 = vmatprep.subr.mxu0 0.0
          %1862 = vmatpush1.xpose.msra.mxu0 0.0
          %1863 = vmatprep.subr.mxu0 0.0
          %1864 = vmatpush1.xpose.msra.mxu0 0.0
          %1865 = vmatprep.subr.mxu0 0.0
          %1866 = vmatpush1.xpose.msra.mxu0 0.0
          %1867 = vmatprep.subr.mxu0 0.0
          %1868 = vmatpush1.xpose.msra.mxu0 0.0
          %1869 = vmatprep.subr.mxu0 0.0
          %1870 = vmatpush1.xpose.msra.mxu0 0.0
          %1871 = vmatprep.subr.mxu0 0.0
          %1872 = vmatpush1.xpose.msra.mxu0 0.0
          %1873 = vmatprep.subr.mxu0 0.0
          %1874 = vmatpush1.xpose.msra.mxu0 0.0
          %1875 = vmatprep.subr.mxu0 0.0
          %1876 = vmatpush1.xpose.msra.mxu0 0.0
          %1877 = vmatprep.subr.mxu0 0.0
          %1878 = vmatpush1.xpose.msra.mxu0 0.0
          %1879 = vmatprep.subr.mxu0 0.0
          %1880 = vmatpush1.xpose.msra.mxu0 0.0
          %1881 = vmatprep.subr.mxu0 0.0
          %1882 = vmatpush1.xpose.msra.mxu0 0.0
          %1883 = vmatprep.subr.mxu0 0.0
          %1884 = vmatpush1.xpose.msra.mxu0 0.0
          %1885 = vmatprep.subr.mxu0 0.0
          %1886 = vmatpush1.xpose.msra.mxu0 0.0
          %1887 = vmatprep.subr.mxu0 0.0
          %1888 = vmatpush1.xpose.msra.mxu0 0.0
          %1889 = vmatprep.subr.mxu0 0.0
          %1890 = vmatpush1.xpose.msra.mxu0 0.0
          %1891 = vmatprep.subr.mxu0 0.0
          %1892 = vmatpush1.xpose.msra.mxu0 0.0
          %1893 = vmatprep.subr.mxu0 0.0
          %1894 = vmatpush1.xpose.msra.mxu0 0.0
          %1895 = vmatprep.subr.mxu0 0.0
          %1896 = vmatpush1.xpose.msra.mxu0 0.0
          %1897 = vmatprep.subr.mxu0 0.0
          %1898 = vmatpush1.xpose.msra.mxu0 0.0
          %1899 = vmatprep.subr.mxu0 0.0
          %1900 = vmatpush1.xpose.msra.mxu0 0.0
          %1901 = vmatprep.subr.mxu0 0.0
          %1902 = vmatpush1.xpose.msra.mxu0 0.0
          %1903 = vmatprep.mubr.f32.mxu0 0.0
          %1904 = vmatmul.mubr.f32.gmra.mrb[0].mxu0 %v1834
          %v1905 = vpop.f32.mrb[0].mxu0
          %v1906 = vadd.f32 %v1832, %v1905
          %v1907 = vpop.f32.mrb[0].mxu0
          %1908 = vdwg.mxu0
          %vm1909 = vcmask 57344
          %1910 = vst.msk [vmem:[%s781] sm:$0x1] %vm1909, %v1906
        $region108: #{tpu_custom_call.1} parent=99 // pred_fallthru
          _
        %s1911 = sand.u32 %s541, 1
        %s1912 = scalar_lea.sflag [#allocation7], %s1911
        %s1913 = sand.u32 %s541, 1
        %s1914 = scalar_lea.vmem [#allocation6], %s1913
        // Predicated region
        $region109: #{tpu_custom_call.1} parent=99 // pred_check
          %p1915 = pneg %p551
        $region110: #{tpu_custom_call.1} parent=99 // pred_check_branch
          %1917 = sbr.rel (%p1915) target = $region112
        $region111: #{tpu_custom_call.1} parent=99 // pred_region
          %s1919 = ssub.s32 16, 16
          %1920 = vsyncadd %s1912, %s1919
          %s1921 = smul.addr %s40, 16
          %s1922 = scalar_lea.hbm %s20, %s1921
          %s1924 = sshll.u32 %s1914, 4
          %s1925 = int_to_ptr.vmem [resolvable:$true] %s1924
          %1927 = dma.vmem_to_hbm [thread:$0]  %s1925, 16, %s1922, %s1912
        $region112: #{tpu_custom_call.1} parent=99 // pred_fallthru
          _
      $region100: #{tpu_custom_call.1} parent=5 // pred_fallthru
        _
      %p1928 = scmp.le.s32.totalorder 2, %s31
      // Predicated region
      $region113: #{tpu_custom_call.1} parent=5 // pred_check
        %p1929 = pneg %p1928
      $region114: #{tpu_custom_call.1} parent=5 // pred_check_branch
        %1931 = sbr.rel (%p1929) target = $region116
      $region115: #{tpu_custom_call.1} parent=5 // pred_region
        %s1932 = ssub.s32 %s31, 2
        // Predicated region
        $region117: #{tpu_custom_call.1} parent=115 // pred_check
          %p1933 = pneg %p557
        $region118: #{tpu_custom_call.1} parent=115 // pred_check_branch
          %1935 = sbr.rel (%p1933) target = $region120
        $region119: #{tpu_custom_call.1} parent=115 // pred_region
          %s1936 = sand.u32 %s542, 1
          %s1937 = scalar_lea.sflag [#allocation7], %s1936
          %s1938 = sand.u32 %s542, 1
          %s1939 = scalar_lea.vmem [#allocation6], %s1938
          %1940 = dma.done %s1937, 16
        $region120: #{tpu_custom_call.1} parent=115 // pred_fallthru
          _
      $region116: #{tpu_custom_call.1} parent=5 // pred_fallthru
        _
    $region6: #{tpu_custom_call.1} parent=1 // loop_footer
      %s35 = sadd.s32 1, %s31
    $region7: #{tpu_custom_call.1} parent=1 // loop_footer_branch
      %30 = sbr.rel target = $region3
    $region8: #{tpu_custom_call.1} parent=1 // loop_exit
      _
    %1941 = vsyncpa [#allocation7], 1
    %s1942 = scalar_lea.sflag [#allocation7], 1
    %1943 = vsyncpa %s1942, 1

</llo_original>
